<compile_context>
chip_gen: v7x
topology: tpu7x:2x2x1
jax: 0.10.0
libtpu: 0.0.40
codegen_flags: <defaults>
</compile_context>

<pallas_src>
import jax
import jax.numpy as jnp
from jax.experimental import pallas as pl
from jax.experimental.pallas import tpu as pltpu

K_IN = 784           # flattened 28*28 input
H1, H2 = 256, 128
H3 = 64
H3_PAD = 128         # hidden-3 padded to a full lane width
N_OUT = 10
N_PAD = 128          # lane-dense output width
NEG_BIG = -1e30      # finite "minus infinity" for padded logit columns


def _round_up(n, m):
    return (n + m - 1) // m * m


def _choose_tile(B, max_tb=1024):
    """Batch tile TB: multiple of 128, <= max_tb.

    Score = padded rows (wasted DMA + MXU work) + steps * 160, where ~160
    f32 rows of x is roughly the DMA-time equivalent of the ~0.35us per-grid-
    step overhead at ~1.4 TB/s HBM.  Static Python, runs at trace time.
    """
    STEP_EQUIV_ROWS = 160
    best_tb, best_score = 128, None
    for tb in range(128, max_tb + 1, 128):
        bp = _round_up(B, tb)
        score = bp + (bp // tb) * STEP_EQUIV_ROWS
        if best_score is None or score < best_score or (
                score == best_score and tb > best_tb):
            best_tb, best_score = tb, score
    return best_tb


def mlp_kernel(x_ref, w1_ref, b1_ref, w2_ref, b2_ref,
               w3_ref, b3_ref, w4_ref, b4_ref, o_ref):
    # x arrives as the raw f32 (TB, 784) tile; cast to bf16 in-kernel so the
    # wrapper never materializes a second (padded, bf16) copy of x in HBM.
    x = x_ref[...].astype(jnp.bfloat16)

    h1 = jnp.dot(x, w1_ref[...], preferred_element_type=jnp.float32) + b1_ref[...]
    h1 = jnp.maximum(h1, 0.0).astype(jnp.bfloat16)

    h2 = jnp.dot(h1, w2_ref[...], preferred_element_type=jnp.float32) + b2_ref[...]
    h2 = jnp.maximum(h2, 0.0).astype(jnp.bfloat16)

    # Hidden-3 padded 64 -> 128 lanes: padded weight cols / bias are zero, so
    # ReLU keeps the padded activation columns exactly zero.
    h3 = jnp.dot(h2, w3_ref[...], preferred_element_type=jnp.float32) + b3_ref[...]
    h3 = jnp.maximum(h3, 0.0).astype(jnp.bfloat16)

    # (TB,128) @ (128,128): padded class columns have zero weights and bias
    # NEG_BIG, so they contribute exp(...) == 0 to the logsumexp below.
    logits = jnp.dot(h3, w4_ref[...], preferred_element_type=jnp.float32) + b4_ref[...]

    # Numerically-stable log_softmax over the (padded) class axis.
    m = jnp.max(logits, axis=1, keepdims=True)
    shifted = logits - m
    lse = jnp.log(jnp.sum(jnp.exp(shifted), axis=1, keepdims=True))
    o_ref[...] = shifted - lse


def classifier_forward(x_nchw, params, max_tb=1024):
    """x_nchw: (B, 1, 28, 28) float32 -> (B, 10) log-probabilities."""
    B = x_nchw.shape[0]
    (w1, b1), (w2, b2), (w3, b3), (w4, b4) = params

    # torch-style .view flatten: a free reshape; keep f32 and unpadded.
    x = x_nchw.reshape(B, -1).astype(jnp.float32)
    assert x.shape[1] == K_IN

    TB = _choose_tile(B, max_tb)
    if B < TB:
        # Tiny batch: pad up to one full tile (cheap at this size).
        x = jnp.pad(x, ((0, TB - B), (0, 0)))
        B_arr = TB
    else:
        # Large batch: rely on Pallas partial last blocks.  Out-of-bounds
        # input rows only affect out-of-bounds output rows (all math is
        # row-wise), and OOB output writes are dropped.
        B_arr = B
    grid = (pl.cdiv(B_arr, TB),)

    # Weights as bf16 (in, out); hidden-3 / class dims zero-padded to 128.
    # NOTE: the zero-padded w4 rows/cols and the NEG_BIG bias on padded class
    # columns must stay coupled for the padded log_softmax to be exact.
    w1b = w1.astype(jnp.bfloat16)                                            # (784,256)
    w2b = w2.astype(jnp.bfloat16)                                            # (256,128)
    w3p = jnp.pad(w3, ((0, 0), (0, H3_PAD - H3))).astype(jnp.bfloat16)       # (128,128)
    w4p = jnp.pad(w4, ((0, H3_PAD - H3), (0, N_PAD - N_OUT))).astype(jnp.bfloat16)  # (128,128)
    b1f = b1.reshape(1, -1).astype(jnp.float32)
    b2f = b2.reshape(1, -1).astype(jnp.float32)
    b3f = jnp.pad(b3.reshape(1, -1), ((0, 0), (0, H3_PAD - H3))).astype(jnp.float32)
    b4f = jnp.pad(b4.reshape(1, -1), ((0, 0), (0, N_PAD - N_OUT)),
                  constant_values=NEG_BIG).astype(jnp.float32)

    def resident(shape):
        # Full-shape block, same block every grid step -> DMA'd once,
        # stays VMEM-resident.
        return pl.BlockSpec(shape, lambda i: (0,) * len(shape))

    in_specs = [
        pl.BlockSpec((TB, K_IN), lambda i: (i, 0)),   # x tile (pipelined)
        resident(w1b.shape), resident(b1f.shape),
        resident(w2b.shape), resident(b2f.shape),
        resident(w3p.shape), resident(b3f.shape),
        resident(w4p.shape), resident(b4f.shape),
    ]
    out_spec = pl.BlockSpec((TB, N_PAD), lambda i: (i, 0))

    flops = 2 * B_arr * (K_IN * H1 + H1 * H2 + H2 * H3_PAD + H3_PAD * N_PAD)
    bytes_accessed = (
        B_arr * K_IN * 4                                             # x (f32, read once)
        + (w1b.size + w2b.size + w3p.size + w4p.size) * 2            # bf16 weights
        + (b1f.size + b2f.size + b3f.size + b4f.size) * 4            # f32 biases
        + B_arr * N_PAD * 4                                          # output
    )

    out = pl.pallas_call(
        mlp_kernel,
        out_shape=jax.ShapeDtypeStruct((B_arr, N_PAD), jnp.float32),
        grid_spec=pl.GridSpec(
            grid=grid,
            in_specs=in_specs,
            out_specs=out_spec,
        ),
        compiler_params=pltpu.CompilerParams(
            dimension_semantics=("parallel",),
            vmem_limit_bytes=40 << 20,
        ),
        cost_estimate=pl.CostEstimate(
            flops=flops,
            transcendentals=B_arr * (N_PAD + 1),
            bytes_accessed=bytes_accessed,
        ),
    )(x, w1b, b1f, w2b, b2f, w3p, b3f, w4p, b4f)

    # If the consumer can take the padded (B_arr, 128) slab this slice can be
    # dropped / fused; kept here to match the (B, 10) torch output contract.
    return out[:B, :N_OUT]


def init_params(key):
    """Deterministic init matching nn.Linear shapes (weights stored as (in, out))."""
    dims = [(K_IN, H1), (H1, H2), (H2, H3), (H3, N_OUT)]
    params = []
    for fan_in, fan_out in dims:
        kw, kb, key = jax.random.split(key, 3)
        bound = 1.0 / jnp.sqrt(fan_in)
        w = jax.random.uniform(kw, (fan_in, fan_out), jnp.float32, -bound, bound)
        b = jax.random.uniform(kb, (1, fan_out), jnp.float32, -bound, bound)
        params.append((w, b))
    return params


def reference_forward(x_nchw, params):
    """Pure-JAX reference with the same bf16-operand / f32-accumulate arithmetic.

    NOTE: bf16 MXU operands deviate slightly (~1e-3) from PyTorch's f32 Linear;
    acceptable for log-probabilities and deliberate for TPU throughput.
    """
    x = x_nchw.reshape(x_nchw.shape[0], -1).astype(jnp.bfloat16)
    (w1, b1), (w2, b2), (w3, b3), (w4, b4) = params

    def lin(a, w, b):
        return jnp.dot(a, w.astype(jnp.bfloat16),
                       preferred_element_type=jnp.float32) + b

    h = jnp.maximum(lin(x, w1, b1), 0.0).astype(jnp.bfloat16)
    h = jnp.maximum(lin(h, w2, b2), 0.0).astype(jnp.bfloat16)
    h = jnp.maximum(lin(h, w3, b3), 0.0).astype(jnp.bfloat16)
    logits = lin(h, w4, b4)
    return jax.nn.log_softmax(logits, axis=1)


if __name__ == "__main__":
    key = jax.random.PRNGKey(0)
    kx, kp = jax.random.split(key)
    params = init_params(kp)

    for B in (8, 200):   # small batch + a non-128-aligned batch (tile-pad path)
        xb = jax.random.normal(jax.random.fold_in(kx, B),
                               (B, 1, 28, 28), jnp.float32)   # NCHW, like MNIST
        out = jax.block_until_ready(classifier_forward(xb, params))
        ref = jax.block_until_ready(reference_forward(xb, params))

        assert out.shape == (B, 10)
        assert jnp.allclose(out, ref, atol=5e-3, rtol=5e-3), "mismatch vs reference"
        # log-probabilities should sum (in prob space) to ~1 per row
        assert jnp.allclose(jnp.sum(jnp.exp(out), axis=1), 1.0, atol=1e-3)

    print("KERNEL_OK")
</pallas_src>

<mosaic_0001>
module attributes {stable_mosaic.version = 11 : i64} {
  func.func @mlp_kernel(%arg0: i32, %arg1: memref<128x784xf32, #tpu.memory_space<vmem>>, %arg2: memref<784x256xbf16, #tpu.memory_space<vmem>>, %arg3: memref<1x256xf32, #tpu.memory_space<vmem>>, %arg4: memref<256x128xbf16, #tpu.memory_space<vmem>>, %arg5: memref<1x128xf32, #tpu.memory_space<vmem>>, %arg6: memref<128x128xbf16, #tpu.memory_space<vmem>>, %arg7: memref<1x128xf32, #tpu.memory_space<vmem>>, %arg8: memref<128x128xbf16, #tpu.memory_space<vmem>>, %arg9: memref<1x128xf32, #tpu.memory_space<vmem>>, %arg10: memref<128x128xf32, #tpu.memory_space<vmem>>) attributes {dimension_semantics = [#tpu.dimension_semantics<parallel>], iteration_bounds = array<i64: 1>, scalar_prefetch = 0 : i64, scratch_operands = 0 : i64, tpu.core_type = #tpu.core_type<tc>, window_params = [{transform_indices = @transform_0, window_bounds = array<i64: 128, 784>}, {pipeline_mode = #tpu.pipeline_mode<synchronous>, transform_indices = @transform_1, window_bounds = array<i64: 784, 256>}, {pipeline_mode = #tpu.pipeline_mode<synchronous>, transform_indices = @transform_2, window_bounds = array<i64: 1, 256>}, {pipeline_mode = #tpu.pipeline_mode<synchronous>, transform_indices = @transform_3, window_bounds = array<i64: 256, 128>}, {pipeline_mode = #tpu.pipeline_mode<synchronous>, transform_indices = @transform_4, window_bounds = array<i64: 1, 128>}, {pipeline_mode = #tpu.pipeline_mode<synchronous>, transform_indices = @transform_5, window_bounds = array<i64: 128, 128>}, {pipeline_mode = #tpu.pipeline_mode<synchronous>, transform_indices = @transform_6, window_bounds = array<i64: 1, 128>}, {pipeline_mode = #tpu.pipeline_mode<synchronous>, transform_indices = @transform_7, window_bounds = array<i64: 128, 128>}, {pipeline_mode = #tpu.pipeline_mode<synchronous>, transform_indices = @transform_8, window_bounds = array<i64: 1, 128>}, {transform_indices = @transform_9, window_bounds = array<i64: 128, 128>}]} {
    %c0 = arith.constant 0 : index
    %c0_0 = arith.constant 0 : index
    %0 = vector.load %arg1[%c0, %c0_0] : memref<128x784xf32, #tpu.memory_space<vmem>>, vector<128x784xf32>
    %1 = arith.truncf %0 : vector<128x784xf32> to vector<128x784xbf16>
    %c0_1 = arith.constant 0 : index
    %c0_2 = arith.constant 0 : index
    %2 = vector.load %arg2[%c0_1, %c0_2] : memref<784x256xbf16, #tpu.memory_space<vmem>>, vector<784x256xbf16>
    %cst = arith.constant dense<0.000000e+00> : vector<128x256xf32>
    %3 = tpu.matmul %1, %2, %cst {dimension_numbers = #tpu.dot_dimension_numbers<[1], [0], [0], [1], [0, 0, 1, 1], [], []>} : vector<128x784xbf16>, vector<784x256xbf16>, vector<128x256xf32> -> vector<128x256xf32>
    %c0_3 = arith.constant 0 : index
    %c0_4 = arith.constant 0 : index
    %4 = vector.load %arg3[%c0_3, %c0_4] : memref<1x256xf32, #tpu.memory_space<vmem>>, vector<1x256xf32>
    %5 = vector.broadcast %4 : vector<1x256xf32> to vector<128x256xf32>
    %6 = arith.addf %3, %5 : vector<128x256xf32>
    %cst_5 = arith.constant 0.000000e+00 : f32
    %7 = vector.broadcast %cst_5 : f32 to vector<128x256xf32>
    %8 = arith.maximumf %6, %7 : vector<128x256xf32>
    %9 = arith.truncf %8 : vector<128x256xf32> to vector<128x256xbf16>
    %c0_6 = arith.constant 0 : index
    %c0_7 = arith.constant 0 : index
    %10 = vector.load %arg4[%c0_6, %c0_7] : memref<256x128xbf16, #tpu.memory_space<vmem>>, vector<256x128xbf16>
    %cst_8 = arith.constant dense<0.000000e+00> : vector<128x128xf32>
    %11 = tpu.matmul %9, %10, %cst_8 {dimension_numbers = #tpu.dot_dimension_numbers<[1], [0], [0], [1], [0, 0, 1, 1], [], []>} : vector<128x256xbf16>, vector<256x128xbf16>, vector<128x128xf32> -> vector<128x128xf32>
    %c0_9 = arith.constant 0 : index
    %c0_10 = arith.constant 0 : index
    %12 = vector.load %arg5[%c0_9, %c0_10] : memref<1x128xf32, #tpu.memory_space<vmem>>, vector<1x128xf32>
    %13 = vector.broadcast %12 : vector<1x128xf32> to vector<128x128xf32>
    %14 = arith.addf %11, %13 : vector<128x128xf32>
    %cst_11 = arith.constant 0.000000e+00 : f32
    %15 = vector.broadcast %cst_11 : f32 to vector<128x128xf32>
    %16 = arith.maximumf %14, %15 : vector<128x128xf32>
    %17 = arith.truncf %16 : vector<128x128xf32> to vector<128x128xbf16>
    %c0_12 = arith.constant 0 : index
    %c0_13 = arith.constant 0 : index
    %18 = vector.load %arg6[%c0_12, %c0_13] : memref<128x128xbf16, #tpu.memory_space<vmem>>, vector<128x128xbf16>
    %cst_14 = arith.constant dense<0.000000e+00> : vector<128x128xf32>
    %19 = tpu.matmul %17, %18, %cst_14 {dimension_numbers = #tpu.dot_dimension_numbers<[1], [0], [0], [1], [0, 0, 1, 1], [], []>} : vector<128x128xbf16>, vector<128x128xbf16>, vector<128x128xf32> -> vector<128x128xf32>
    %c0_15 = arith.constant 0 : index
    %c0_16 = arith.constant 0 : index
    %20 = vector.load %arg7[%c0_15, %c0_16] : memref<1x128xf32, #tpu.memory_space<vmem>>, vector<1x128xf32>
    %21 = vector.broadcast %20 : vector<1x128xf32> to vector<128x128xf32>
    %22 = arith.addf %19, %21 : vector<128x128xf32>
    %cst_17 = arith.constant 0.000000e+00 : f32
    %23 = vector.broadcast %cst_17 : f32 to vector<128x128xf32>
    %24 = arith.maximumf %22, %23 : vector<128x128xf32>
    %25 = arith.truncf %24 : vector<128x128xf32> to vector<128x128xbf16>
    %c0_18 = arith.constant 0 : index
    %c0_19 = arith.constant 0 : index
    %26 = vector.load %arg8[%c0_18, %c0_19] : memref<128x128xbf16, #tpu.memory_space<vmem>>, vector<128x128xbf16>
    %cst_20 = arith.constant dense<0.000000e+00> : vector<128x128xf32>
    %27 = tpu.matmul %25, %26, %cst_20 {dimension_numbers = #tpu.dot_dimension_numbers<[1], [0], [0], [1], [0, 0, 1, 1], [], []>} : vector<128x128xbf16>, vector<128x128xbf16>, vector<128x128xf32> -> vector<128x128xf32>
    %c0_21 = arith.constant 0 : index
    %c0_22 = arith.constant 0 : index
    %28 = vector.load %arg9[%c0_21, %c0_22] : memref<1x128xf32, #tpu.memory_space<vmem>>, vector<1x128xf32>
    %29 = vector.broadcast %28 : vector<1x128xf32> to vector<128x128xf32>
    %30 = arith.addf %27, %29 : vector<128x128xf32>
    %cst_23 = arith.constant dense<0xFF800000> : vector<128xf32>
    %31 = vector.multi_reduction <maximumf>, %30, %cst_23 [1] : vector<128x128xf32> to vector<128xf32>
    %32 = vector.shape_cast %31 : vector<128xf32> to vector<128x1xf32>
    %33 = vector.broadcast %32 : vector<128x1xf32> to vector<128x128xf32>
    %34 = arith.subf %30, %33 : vector<128x128xf32>
    %35 = math.exp %34 : vector<128x128xf32>
    %cst_24 = arith.constant dense<0.000000e+00> : vector<128xf32>
    %36 = vector.multi_reduction <add>, %35, %cst_24 [1] : vector<128x128xf32> to vector<128xf32>
    %37 = vector.shape_cast %36 : vector<128xf32> to vector<128x1xf32>
    %38 = math.log %37 : vector<128x1xf32>
    %39 = vector.broadcast %38 : vector<128x1xf32> to vector<128x128xf32>
    %40 = arith.subf %34, %39 : vector<128x128xf32>
    %c0_25 = arith.constant 0 : index
    %c0_26 = arith.constant 0 : index
    %41 = vector.load %arg10[%c0_25, %c0_26] : memref<128x128xf32, #tpu.memory_space<vmem>>, vector<128x128xf32>
    tpu.vector_store %arg10[%c0_25, %c0_26], %40 {strides = array<i32>} : memref<128x128xf32, #tpu.memory_space<vmem>>, vector<128x128xf32>,
    return
  }
  func.func @transform_0(%arg0: i32) -> (i32, i32) {
    %c0_i32 = arith.constant 0 : i32
    %c0_i32_0 = arith.constant 0 : i32
    return %arg0, %c0_i32 : i32, i32
  }
  func.func @transform_1(%arg0: i32) -> (i32, i32) {
    %c0_i32 = arith.constant 0 : i32
    %c0_i32_0 = arith.constant 0 : i32
    %c0_i32_1 = arith.constant 0 : i32
    return %c0_i32, %c0_i32_0 : i32, i32
  }
  func.func @transform_2(%arg0: i32) -> (i32, i32) {
    %c0_i32 = arith.constant 0 : i32
    %c0_i32_0 = arith.constant 0 : i32
    %c0_i32_1 = arith.constant 0 : i32
    return %c0_i32, %c0_i32_0 : i32, i32
  }
  func.func @transform_3(%arg0: i32) -> (i32, i32) {
    %c0_i32 = arith.constant 0 : i32
    %c0_i32_0 = arith.constant 0 : i32
    %c0_i32_1 = arith.constant 0 : i32
    return %c0_i32, %c0_i32_0 : i32, i32
  }
  func.func @transform_4(%arg0: i32) -> (i32, i32) {
    %c0_i32 = arith.constant 0 : i32
    %c0_i32_0 = arith.constant 0 : i32
    %c0_i32_1 = arith.constant 0 : i32
    return %c0_i32, %c0_i32_0 : i32, i32
  }
  func.func @transform_5(%arg0: i32) -> (i32, i32) {
    %c0_i32 = arith.constant 0 : i32
    %c0_i32_0 = arith.constant 0 : i32
    %c0_i32_1 = arith.constant 0 : i32
    return %c0_i32, %c0_i32_0 : i32, i32
  }
  func.func @transform_6(%arg0: i32) -> (i32, i32) {
    %c0_i32 = arith.constant 0 : i32
    %c0_i32_0 = arith.constant 0 : i32
    %c0_i32_1 = arith.constant 0 : i32
    return %c0_i32, %c0_i32_0 : i32, i32
  }
  func.func @transform_7(%arg0: i32) -> (i32, i32) {
    %c0_i32 = arith.constant 0 : i32
    %c0_i32_0 = arith.constant 0 : i32
    %c0_i32_1 = arith.constant 0 : i32
    return %c0_i32, %c0_i32_0 : i32, i32
  }
  func.func @transform_8(%arg0: i32) -> (i32, i32) {
    %c0_i32 = arith.constant 0 : i32
    %c0_i32_0 = arith.constant 0 : i32
    %c0_i32_1 = arith.constant 0 : i32
    return %c0_i32, %c0_i32_0 : i32, i32
  }
  func.func @transform_9(%arg0: i32) -> (i32, i32) {
    %c0_i32 = arith.constant 0 : i32
    %c0_i32_0 = arith.constant 0 : i32
    return %arg0, %c0_i32 : i32, i32
  }
}

</mosaic_0001>

<llo_original>
// kernel: tpu_custom_call.1
$region0: #{tpu_custom_call.1}
  #allocation0 [shape = 'u32[]', space=smem, size = 0x4, offset = 0x4, fixed_abs, tag = 'smem constant byte address 0x4 - core index']
  #allocation1 [shape = 'u32[144,128]{1,0:T(1,128)}', space=vmem, size = 0x12000, scoped, tag = 'internal scratch']
  %s0 = inlined_call_operand.vmem [shape: f32[128,784], index: 0, kind: input, shape index: {}]
  %s1 = inlined_call_operand.vmem [shape: bf16[784,256], index: 1, kind: input, shape index: {}]
  %s2 = inlined_call_operand.vmem [shape: f32[1,256], index: 2, kind: input, shape index: {}]
  %s3 = inlined_call_operand.vmem [shape: bf16[256,128], index: 3, kind: input, shape index: {}]
  %s4 = inlined_call_operand.vmem [shape: f32[1,128], index: 4, kind: input, shape index: {}]
  %s5 = inlined_call_operand.vmem [shape: bf16[128,128], index: 5, kind: input, shape index: {}]
  %s6 = inlined_call_operand.vmem [shape: f32[1,128], index: 6, kind: input, shape index: {}]
  %s7 = inlined_call_operand.vmem [shape: bf16[128,128], index: 7, kind: input, shape index: {}]
  %s8 = inlined_call_operand.vmem [shape: f32[1,128], index: 8, kind: input, shape index: {}]
  %s9 = inlined_call_operand.hbm [shape: f32[128,128], index: 9, kind: output, shape index: {}]
  %s10 = sld [smem:[#allocation0]]
  $region46: #{tpu_custom_call.1} parent=0
    _
  %s12 = ssub.s32 1, %s10
  %s13 = scalar_select 0, %s12, %s10
  $region1: #{tpu_custom_call.1} parent=0
    #allocation2 [shape = 'u8[65536]{0}', space=vmem, size = 0x10000, scoped, tag = 'output window, operand 0, single buffered']
    #allocation3 [shape = 's32[1]{0}', space=sflag, size = 0x4, scoped, tag = 'scoped memory for tpu_custom_call.1']
    %14 = vsyncpa [#allocation3], 0
    // Predicated region
    $region2: #{tpu_custom_call.1} parent=1 // pred_check
      _
    $region3: #{tpu_custom_call.1} parent=1 // pred_check_branch
      %16 = sbr.rel (0) target = $region5
    $region4: #{tpu_custom_call.1} parent=1 // pred_region
      _
    $region5: #{tpu_custom_call.1} parent=1 // pred_fallthru
      _
    // Predicated region
    $region6: #{tpu_custom_call.1} parent=1 // pred_check
      _
    $region7: #{tpu_custom_call.1} parent=1 // pred_check_branch
      %18 = sbr.rel (0) target = $region9
    $region8: #{tpu_custom_call.1} parent=1 // pred_region
      _
    $region9: #{tpu_custom_call.1} parent=1 // pred_fallthru
      _
    // Predicated region
    $region10: #{tpu_custom_call.1} parent=1 // pred_check
      _
    $region11: #{tpu_custom_call.1} parent=1 // pred_check_branch
      %20 = sbr.rel (0) target = $region13
    $region12: #{tpu_custom_call.1} parent=1 // pred_region
      _
    $region13: #{tpu_custom_call.1} parent=1 // pred_fallthru
      _
    // Predicated region
    $region14: #{tpu_custom_call.1} parent=1 // pred_check
      _
    $region15: #{tpu_custom_call.1} parent=1 // pred_check_branch
      %22 = sbr.rel (0) target = $region17
    $region16: #{tpu_custom_call.1} parent=1 // pred_region
      _
    $region17: #{tpu_custom_call.1} parent=1 // pred_fallthru
      _
    // Predicated region
    $region18: #{tpu_custom_call.1} parent=1 // pred_check
      _
    $region19: #{tpu_custom_call.1} parent=1 // pred_check_branch
      %24 = sbr.rel (0) target = $region21
    $region20: #{tpu_custom_call.1} parent=1 // pred_region
      _
    $region21: #{tpu_custom_call.1} parent=1 // pred_fallthru
      _
    // Predicated region
    $region22: #{tpu_custom_call.1} parent=1 // pred_check
      _
    $region23: #{tpu_custom_call.1} parent=1 // pred_check_branch
      %26 = sbr.rel (0) target = $region25
    $region24: #{tpu_custom_call.1} parent=1 // pred_region
      _
    $region25: #{tpu_custom_call.1} parent=1 // pred_fallthru
      _
    // Predicated region
    $region26: #{tpu_custom_call.1} parent=1 // pred_check
      _
    $region27: #{tpu_custom_call.1} parent=1 // pred_check_branch
      %28 = sbr.rel (0) target = $region29
    $region28: #{tpu_custom_call.1} parent=1 // pred_region
      _
    $region29: #{tpu_custom_call.1} parent=1 // pred_fallthru
      _
    // Predicated region
    $region30: #{tpu_custom_call.1} parent=1 // pred_check
      _
    $region31: #{tpu_custom_call.1} parent=1 // pred_check_branch
      %30 = sbr.rel (0) target = $region33
    $region32: #{tpu_custom_call.1} parent=1 // pred_region
      _
    $region33: #{tpu_custom_call.1} parent=1 // pred_fallthru
      _
    // Predicated region
    $region34: #{tpu_custom_call.1} parent=1 // pred_check
      _
    $region35: #{tpu_custom_call.1} parent=1 // pred_check_branch
      %32 = sbr.rel (0) target = $region37
    $region36: #{tpu_custom_call.1} parent=1 // pred_region
      _
    $region37: #{tpu_custom_call.1} parent=1 // pred_fallthru
      _
    %v34 = vld [vmem:[%s0] sm:$0xff]
    %v35 = vld [vmem:[%s0 + $0x8] sm:$0xff]
    %v36 = vld [vmem:[%s0 + $0x10] sm:$0xff]
    %v37 = vld [vmem:[%s0 + $0x18] sm:$0xff]
    %v38 = vld [vmem:[%s0 + $0x20] sm:$0xff]
    %v39 = vld [vmem:[%s0 + $0x28] sm:$0xff]
    %v40 = vld [vmem:[%s0 + $0x30] sm:$0xff]
    %v41 = vld [vmem:[%s0 + $0x38] sm:$0xff]
    %v42 = vld [vmem:[%s0 + $0x40] sm:$0xff]
    %v43 = vld [vmem:[%s0 + $0x48] sm:$0xff]
    %v44 = vld [vmem:[%s0 + $0x50] sm:$0xff]
    %v45 = vld [vmem:[%s0 + $0x58] sm:$0xff]
    %v46 = vld [vmem:[%s0 + $0x60] sm:$0xff]
    %v47 = vld [vmem:[%s0 + $0x68] sm:$0xff]
    %v48 = vld [vmem:[%s0 + $0x70] sm:$0xff]
    %v49 = vld [vmem:[%s0 + $0x78] sm:$0xff]
    %v50 = vld [vmem:[%s0 + $0x80] sm:$0xff]
    %v51 = vld [vmem:[%s0 + $0x88] sm:$0xff]
    %v52 = vld [vmem:[%s0 + $0x90] sm:$0xff]
    %v53 = vld [vmem:[%s0 + $0x98] sm:$0xff]
    %v54 = vld [vmem:[%s0 + $0xa0] sm:$0xff]
    %v55 = vld [vmem:[%s0 + $0xa8] sm:$0xff]
    %v56 = vld [vmem:[%s0 + $0xb0] sm:$0xff]
    %v57 = vld [vmem:[%s0 + $0xb8] sm:$0xff]
    %v58 = vld [vmem:[%s0 + $0xc0] sm:$0xff]
    %v59 = vld [vmem:[%s0 + $0xc8] sm:$0xff]
    %v60 = vld [vmem:[%s0 + $0xd0] sm:$0xff]
    %v61 = vld [vmem:[%s0 + $0xd8] sm:$0xff]
    %v62 = vld [vmem:[%s0 + $0xe0] sm:$0xff]
    %v63 = vld [vmem:[%s0 + $0xe8] sm:$0xff]
    %v64 = vld [vmem:[%s0 + $0xf0] sm:$0xff]
    %v65 = vld [vmem:[%s0 + $0xf8] sm:$0xff]
    %v66 = vld [vmem:[%s0 + $0x100] sm:$0xff]
    %v67 = vld [vmem:[%s0 + $0x108] sm:$0xff]
    %v68 = vld [vmem:[%s0 + $0x110] sm:$0xff]
    %v69 = vld [vmem:[%s0 + $0x118] sm:$0xff]
    %v70 = vld [vmem:[%s0 + $0x120] sm:$0xff]
    %v71 = vld [vmem:[%s0 + $0x128] sm:$0xff]
    %v72 = vld [vmem:[%s0 + $0x130] sm:$0xff]
    %v73 = vld [vmem:[%s0 + $0x138] sm:$0xff]
    %v74 = vld [vmem:[%s0 + $0x140] sm:$0xff]
    %v75 = vld [vmem:[%s0 + $0x148] sm:$0xff]
    %v76 = vld [vmem:[%s0 + $0x150] sm:$0xff]
    %v77 = vld [vmem:[%s0 + $0x158] sm:$0xff]
    %v78 = vld [vmem:[%s0 + $0x160] sm:$0xff]
    %v79 = vld [vmem:[%s0 + $0x168] sm:$0xff]
    %v80 = vld [vmem:[%s0 + $0x170] sm:$0xff]
    %v81 = vld [vmem:[%s0 + $0x178] sm:$0xff]
    %v82 = vld [vmem:[%s0 + $0x180] sm:$0xff]
    %v83 = vld [vmem:[%s0 + $0x188] sm:$0xff]
    %v84 = vld [vmem:[%s0 + $0x190] sm:$0xff]
    %v85 = vld [vmem:[%s0 + $0x198] sm:$0xff]
    %v86 = vld [vmem:[%s0 + $0x1a0] sm:$0xff]
    %v87 = vld [vmem:[%s0 + $0x1a8] sm:$0xff]
    %v88 = vld [vmem:[%s0 + $0x1b0] sm:$0xff]
    %v89 = vld [vmem:[%s0 + $0x1b8] sm:$0xff]
    %v90 = vld [vmem:[%s0 + $0x1c0] sm:$0xff]
    %v91 = vld [vmem:[%s0 + $0x1c8] sm:$0xff]
    %v92 = vld [vmem:[%s0 + $0x1d0] sm:$0xff]
    %v93 = vld [vmem:[%s0 + $0x1d8] sm:$0xff]
    %v94 = vld [vmem:[%s0 + $0x1e0] sm:$0xff]
    %v95 = vld [vmem:[%s0 + $0x1e8] sm:$0xff]
    %v96 = vld [vmem:[%s0 + $0x1f0] sm:$0xff]
    %v97 = vld [vmem:[%s0 + $0x1f8] sm:$0xff]
    %v98 = vld [vmem:[%s0 + $0x200] sm:$0xff]
    %v99 = vld [vmem:[%s0 + $0x208] sm:$0xff]
    %v100 = vld [vmem:[%s0 + $0x210] sm:$0xff]
    %v101 = vld [vmem:[%s0 + $0x218] sm:$0xff]
    %v102 = vld [vmem:[%s0 + $0x220] sm:$0xff]
    %v103 = vld [vmem:[%s0 + $0x228] sm:$0xff]
    %v104 = vld [vmem:[%s0 + $0x230] sm:$0xff]
    %v105 = vld [vmem:[%s0 + $0x238] sm:$0xff]
    %v106 = vld [vmem:[%s0 + $0x240] sm:$0xff]
    %v107 = vld [vmem:[%s0 + $0x248] sm:$0xff]
    %v108 = vld [vmem:[%s0 + $0x250] sm:$0xff]
    %v109 = vld [vmem:[%s0 + $0x258] sm:$0xff]
    %v110 = vld [vmem:[%s0 + $0x260] sm:$0xff]
    %v111 = vld [vmem:[%s0 + $0x268] sm:$0xff]
    %v112 = vld [vmem:[%s0 + $0x270] sm:$0xff]
    %v113 = vld [vmem:[%s0 + $0x278] sm:$0xff]
    %v114 = vld [vmem:[%s0 + $0x280] sm:$0xff]
    %v115 = vld [vmem:[%s0 + $0x288] sm:$0xff]
    %v116 = vld [vmem:[%s0 + $0x290] sm:$0xff]
    %v117 = vld [vmem:[%s0 + $0x298] sm:$0xff]
    %v118 = vld [vmem:[%s0 + $0x2a0] sm:$0xff]
    %v119 = vld [vmem:[%s0 + $0x2a8] sm:$0xff]
    %v120 = vld [vmem:[%s0 + $0x2b0] sm:$0xff]
    %v121 = vld [vmem:[%s0 + $0x2b8] sm:$0xff]
    %v122 = vld [vmem:[%s0 + $0x2c0] sm:$0xff]
    %v123 = vld [vmem:[%s0 + $0x2c8] sm:$0xff]
    %v124 = vld [vmem:[%s0 + $0x2d0] sm:$0xff]
    %v125 = vld [vmem:[%s0 + $0x2d8] sm:$0xff]
    %v126 = vld [vmem:[%s0 + $0x2e0] sm:$0xff]
    %v127 = vld [vmem:[%s0 + $0x2e8] sm:$0xff]
    %v128 = vld [vmem:[%s0 + $0x2f0] sm:$0xff]
    %v129 = vld [vmem:[%s0 + $0x2f8] sm:$0xff]
    %v130 = vld [vmem:[%s0 + $0x300] sm:$0xff]
    %v131 = vld [vmem:[%s0 + $0x308] sm:$0xff]
    %v132 = vld [vmem:[%s0 + $0x310] sm:$0xff]
    %v133 = vld [vmem:[%s0 + $0x318] sm:$0xff]
    %v134 = vld [vmem:[%s0 + $0x320] sm:$0xff]
    %v135 = vld [vmem:[%s0 + $0x328] sm:$0xff]
    %v136 = vld [vmem:[%s0 + $0x330] sm:$0xff]
    %v137 = vld [vmem:[%s0 + $0x338] sm:$0xff]
    %v138 = vld [vmem:[%s0 + $0x340] sm:$0xff]
    %v139 = vld [vmem:[%s0 + $0x348] sm:$0xff]
    %v140 = vld [vmem:[%s0 + $0x350] sm:$0xff]
    %v141 = vld [vmem:[%s0 + $0x358] sm:$0xff]
    %v142 = vld [vmem:[%s0 + $0x360] sm:$0xff]
    %v143 = vld [vmem:[%s0 + $0x368] sm:$0xff]
    %v144 = vld [vmem:[%s0 + $0x370] sm:$0xff]
    %v145 = vld [vmem:[%s0 + $0x378] sm:$0xff]
    %v146 = vpack.c.bf16 %v41, %v34
    %v147 = vpack.c.bf16 %v42, %v35
    %v148 = vpack.c.bf16 %v43, %v36
    %v149 = vpack.c.bf16 %v44, %v37
    %v150 = vpack.c.bf16 %v45, %v38
    %v151 = vpack.c.bf16 %v46, %v39
    %v152 = vpack.c.bf16 %v47, %v40
    %v153 = vpack.c.bf16 %v55, %v48
    %v154 = vpack.c.bf16 %v56, %v49
    %v155 = vpack.c.bf16 %v57, %v50
    %v156 = vpack.c.bf16 %v58, %v51
    %v157 = vpack.c.bf16 %v59, %v52
    %v158 = vpack.c.bf16 %v60, %v53
    %v159 = vpack.c.bf16 %v61, %v54
    %v160 = vpack.c.bf16 %v69, %v62
    %v161 = vpack.c.bf16 %v70, %v63
    %v162 = vpack.c.bf16 %v71, %v64
    %v163 = vpack.c.bf16 %v72, %v65
    %v164 = vpack.c.bf16 %v73, %v66
    %v165 = vpack.c.bf16 %v74, %v67
    %v166 = vpack.c.bf16 %v75, %v68
    %v167 = vpack.c.bf16 %v83, %v76
    %v168 = vpack.c.bf16 %v84, %v77
    %v169 = vpack.c.bf16 %v85, %v78
    %v170 = vpack.c.bf16 %v86, %v79
    %v171 = vpack.c.bf16 %v87, %v80
    %v172 = vpack.c.bf16 %v88, %v81
    %v173 = vpack.c.bf16 %v89, %v82
    %v174 = vpack.c.bf16 %v97, %v90
    %v175 = vpack.c.bf16 %v98, %v91
    %v176 = vpack.c.bf16 %v99, %v92
    %v177 = vpack.c.bf16 %v100, %v93
    %v178 = vpack.c.bf16 %v101, %v94
    %v179 = vpack.c.bf16 %v102, %v95
    %v180 = vpack.c.bf16 %v103, %v96
    %v181 = vpack.c.bf16 %v111, %v104
    %v182 = vpack.c.bf16 %v112, %v105
    %v183 = vpack.c.bf16 %v113, %v106
    %v184 = vpack.c.bf16 %v114, %v107
    %v185 = vpack.c.bf16 %v115, %v108
    %v186 = vpack.c.bf16 %v116, %v109
    %v187 = vpack.c.bf16 %v117, %v110
    %v188 = vpack.c.bf16 %v125, %v118
    %v189 = vpack.c.bf16 %v126, %v119
    %v190 = vpack.c.bf16 %v127, %v120
    %v191 = vpack.c.bf16 %v128, %v121
    %v192 = vpack.c.bf16 %v129, %v122
    %v193 = vpack.c.bf16 %v130, %v123
    %v194 = vpack.c.bf16 %v131, %v124
    %v195 = vpack.c.bf16 %v139, %v132
    %v196 = vpack.c.bf16 %v140, %v133
    %v197 = vpack.c.bf16 %v141, %v134
    %v198 = vpack.c.bf16 %v142, %v135
    %v199 = vpack.c.bf16 %v143, %v136
    %v200 = vpack.c.bf16 %v144, %v137
    %v201 = vpack.c.bf16 %v145, %v138
    %v202 = vld [vmem:[%s1] sm:$0xff]
    %v203 = vld [vmem:[%s1 + $0x8] sm:$0xff]
    %v204 = vld [vmem:[%s1 + $0x10] sm:$0xff]
    %v205 = vld [vmem:[%s1 + $0x18] sm:$0xff]
    %v206 = vld [vmem:[%s1 + $0x20] sm:$0xff]
    %v207 = vld [vmem:[%s1 + $0x28] sm:$0xff]
    %v208 = vld [vmem:[%s1 + $0x30] sm:$0xff]
    %v209 = vld [vmem:[%s1 + $0x38] sm:$0xff]
    %v210 = vld [vmem:[%s1 + $0x40] sm:$0xff]
    %v211 = vld [vmem:[%s1 + $0x48] sm:$0xff]
    %v212 = vld [vmem:[%s1 + $0x50] sm:$0xff]
    %v213 = vld [vmem:[%s1 + $0x58] sm:$0xff]
    %v214 = vld [vmem:[%s1 + $0x60] sm:$0xff]
    %v215 = vld [vmem:[%s1 + $0x68] sm:$0xff]
    %v216 = vld [vmem:[%s1 + $0x70] sm:$0xff]
    %v217 = vld [vmem:[%s1 + $0x78] sm:$0xff]
    %v218 = vld [vmem:[%s1 + $0x80] sm:$0xff]
    %v219 = vld [vmem:[%s1 + $0x88] sm:$0xff]
    %v220 = vld [vmem:[%s1 + $0x90] sm:$0xff]
    %v221 = vld [vmem:[%s1 + $0x98] sm:$0xff]
    %v222 = vld [vmem:[%s1 + $0xa0] sm:$0xff]
    %v223 = vld [vmem:[%s1 + $0xa8] sm:$0xff]
    %v224 = vld [vmem:[%s1 + $0xb0] sm:$0xff]
    %v225 = vld [vmem:[%s1 + $0xb8] sm:$0xff]
    %v226 = vld [vmem:[%s1 + $0xc0] sm:$0xff]
    %v227 = vld [vmem:[%s1 + $0xc8] sm:$0xff]
    %v228 = vld [vmem:[%s1 + $0xd0] sm:$0xff]
    %v229 = vld [vmem:[%s1 + $0xd8] sm:$0xff]
    %v230 = vld [vmem:[%s1 + $0xe0] sm:$0xff]
    %v231 = vld [vmem:[%s1 + $0xe8] sm:$0xff]
    %v232 = vld [vmem:[%s1 + $0xf0] sm:$0xff]
    %v233 = vld [vmem:[%s1 + $0xf8] sm:$0xff]
    %v234 = vld [vmem:[%s1 + $0x100] sm:$0xff]
    %v235 = vld [vmem:[%s1 + $0x108] sm:$0xff]
    %v236 = vld [vmem:[%s1 + $0x110] sm:$0xff]
    %v237 = vld [vmem:[%s1 + $0x118] sm:$0xff]
    %v238 = vld [vmem:[%s1 + $0x120] sm:$0xff]
    %v239 = vld [vmem:[%s1 + $0x128] sm:$0xff]
    %v240 = vld [vmem:[%s1 + $0x130] sm:$0xff]
    %v241 = vld [vmem:[%s1 + $0x138] sm:$0xff]
    %v242 = vld [vmem:[%s1 + $0x140] sm:$0xff]
    %v243 = vld [vmem:[%s1 + $0x148] sm:$0xff]
    %v244 = vld [vmem:[%s1 + $0x150] sm:$0xff]
    %v245 = vld [vmem:[%s1 + $0x158] sm:$0xff]
    %v246 = vld [vmem:[%s1 + $0x160] sm:$0xff]
    %v247 = vld [vmem:[%s1 + $0x168] sm:$0xff]
    %v248 = vld [vmem:[%s1 + $0x170] sm:$0xff]
    %v249 = vld [vmem:[%s1 + $0x178] sm:$0xff]
    %v250 = vld [vmem:[%s1 + $0x180] sm:$0xff]
    %v251 = vld [vmem:[%s1 + $0x188] sm:$0xff]
    %v252 = vld [vmem:[%s1 + $0x190] sm:$0xff]
    %v253 = vld [vmem:[%s1 + $0x198] sm:$0xff]
    %v254 = vld [vmem:[%s1 + $0x1a0] sm:$0xff]
    %v255 = vld [vmem:[%s1 + $0x1a8] sm:$0xff]
    %v256 = vld [vmem:[%s1 + $0x1b0] sm:$0xff]
    %v257 = vld [vmem:[%s1 + $0x1b8] sm:$0xff]
    %v258 = vld [vmem:[%s1 + $0x1c0] sm:$0xff]
    %v259 = vld [vmem:[%s1 + $0x1c8] sm:$0xff]
    %v260 = vld [vmem:[%s1 + $0x1d0] sm:$0xff]
    %v261 = vld [vmem:[%s1 + $0x1d8] sm:$0xff]
    %v262 = vld [vmem:[%s1 + $0x1e0] sm:$0xff]
    %v263 = vld [vmem:[%s1 + $0x1e8] sm:$0xff]
    %v264 = vld [vmem:[%s1 + $0x1f0] sm:$0xff]
    %v265 = vld [vmem:[%s1 + $0x1f8] sm:$0xff]
    %v266 = vld [vmem:[%s1 + $0x200] sm:$0xff]
    %v267 = vld [vmem:[%s1 + $0x208] sm:$0xff]
    %v268 = vld [vmem:[%s1 + $0x210] sm:$0xff]
    %v269 = vld [vmem:[%s1 + $0x218] sm:$0xff]
    %v270 = vld [vmem:[%s1 + $0x220] sm:$0xff]
    %v271 = vld [vmem:[%s1 + $0x228] sm:$0xff]
    %v272 = vld [vmem:[%s1 + $0x230] sm:$0xff]
    %v273 = vld [vmem:[%s1 + $0x238] sm:$0xff]
    %v274 = vld [vmem:[%s1 + $0x240] sm:$0xff]
    %v275 = vld [vmem:[%s1 + $0x248] sm:$0xff]
    %v276 = vld [vmem:[%s1 + $0x250] sm:$0xff]
    %v277 = vld [vmem:[%s1 + $0x258] sm:$0xff]
    %v278 = vld [vmem:[%s1 + $0x260] sm:$0xff]
    %v279 = vld [vmem:[%s1 + $0x268] sm:$0xff]
    %v280 = vld [vmem:[%s1 + $0x270] sm:$0xff]
    %v281 = vld [vmem:[%s1 + $0x278] sm:$0xff]
    %v282 = vld [vmem:[%s1 + $0x280] sm:$0xff]
    %v283 = vld [vmem:[%s1 + $0x288] sm:$0xff]
    %v284 = vld [vmem:[%s1 + $0x290] sm:$0xff]
    %v285 = vld [vmem:[%s1 + $0x298] sm:$0xff]
    %v286 = vld [vmem:[%s1 + $0x2a0] sm:$0xff]
    %v287 = vld [vmem:[%s1 + $0x2a8] sm:$0xff]
    %v288 = vld [vmem:[%s1 + $0x2b0] sm:$0xff]
    %v289 = vld [vmem:[%s1 + $0x2b8] sm:$0xff]
    %v290 = vld [vmem:[%s1 + $0x2c0] sm:$0xff]
    %v291 = vld [vmem:[%s1 + $0x2c8] sm:$0xff]
    %v292 = vld [vmem:[%s1 + $0x2d0] sm:$0xff]
    %v293 = vld [vmem:[%s1 + $0x2d8] sm:$0xff]
    %v294 = vld [vmem:[%s1 + $0x2e0] sm:$0xff]
    %v295 = vld [vmem:[%s1 + $0x2e8] sm:$0xff]
    %v296 = vld [vmem:[%s1 + $0x2f0] sm:$0xff]
    %v297 = vld [vmem:[%s1 + $0x2f8] sm:$0xff]
    %v298 = vld [vmem:[%s1 + $0x300] sm:$0xff]
    %v299 = vld [vmem:[%s1 + $0x308] sm:$0xff]
    %v300 = vld [vmem:[%s2] sm:$0x3]
    %v302 = vlaneseq
    %v303 = vshrl.u32 %v302, 7
    %v304 = vsub.s32 0, %v303
    %v305 = vrot.slane %v300, %v304
    %v306 = vlaneseq
    %v307 = vshrl.u32 %v306, 7
    %v308 = vsub.s32 1, %v307
    %v309 = vrot.slane %v300, %v308
    %v410 = vunpack.c.l.b16 %v202
    %v411 = vunpack.c.h.b16 %v202
    %v412 = vunpack.c.l.b16 %v203
    %v413 = vunpack.c.h.b16 %v203
    %v414 = vunpack.c.l.b16 %v204
    %v415 = vunpack.c.h.b16 %v204
    %v416 = vunpack.c.l.b16 %v205
    %v417 = vunpack.c.h.b16 %v205
    %v418 = vunpack.c.l.b16 %v206
    %v419 = vunpack.c.h.b16 %v206
    %v420 = vunpack.c.l.b16 %v207
    %v421 = vunpack.c.h.b16 %v207
    %v422 = vunpack.c.l.b16 %v208
    %v423 = vunpack.c.h.b16 %v208
    %v424 = vunpack.c.l.b16 %v209
    %v425 = vunpack.c.h.b16 %v209
    %v426 = vunpack.c.l.b16 %v210
    %v427 = vunpack.c.h.b16 %v210
    %v428 = vunpack.c.l.b16 %v211
    %v429 = vunpack.c.h.b16 %v211
    %v430 = vunpack.c.l.b16 %v212
    %v431 = vunpack.c.h.b16 %v212
    %v432 = vunpack.c.l.b16 %v213
    %v433 = vunpack.c.h.b16 %v213
    %v434 = vunpack.c.l.b16 %v214
    %v435 = vunpack.c.h.b16 %v214
    %v436 = vunpack.c.l.b16 %v215
    %v437 = vunpack.c.h.b16 %v215
    %v438 = vunpack.c.l.b16 %v216
    %v439 = vunpack.c.h.b16 %v216
    %v440 = vunpack.c.l.b16 %v217
    %v441 = vunpack.c.h.b16 %v217
    %v442 = vunpack.c.l.b16 %v218
    %v443 = vunpack.c.h.b16 %v218
    %v444 = vunpack.c.l.b16 %v219
    %v445 = vunpack.c.h.b16 %v219
    %v446 = vunpack.c.l.b16 %v220
    %v447 = vunpack.c.h.b16 %v220
    %v448 = vunpack.c.l.b16 %v221
    %v449 = vunpack.c.h.b16 %v221
    %v450 = vunpack.c.l.b16 %v222
    %v451 = vunpack.c.h.b16 %v222
    %v452 = vunpack.c.l.b16 %v223
    %v453 = vunpack.c.h.b16 %v223
    %v454 = vunpack.c.l.b16 %v224
    %v455 = vunpack.c.h.b16 %v224
    %v456 = vunpack.c.l.b16 %v225
    %v457 = vunpack.c.h.b16 %v225
    %v458 = vunpack.c.l.b16 %v226
    %v459 = vunpack.c.h.b16 %v226
    %v460 = vunpack.c.l.b16 %v227
    %v461 = vunpack.c.h.b16 %v227
    %v462 = vunpack.c.l.b16 %v228
    %v463 = vunpack.c.h.b16 %v228
    %v464 = vunpack.c.l.b16 %v229
    %v465 = vunpack.c.h.b16 %v229
    %v466 = vunpack.c.l.b16 %v230
    %v467 = vunpack.c.h.b16 %v230
    %v468 = vunpack.c.l.b16 %v231
    %v469 = vunpack.c.h.b16 %v231
    %v470 = vunpack.c.l.b16 %v232
    %v471 = vunpack.c.h.b16 %v232
    %v472 = vunpack.c.l.b16 %v233
    %v473 = vunpack.c.h.b16 %v233
    %v474 = vunpack.c.l.b16 %v234
    %v475 = vunpack.c.h.b16 %v234
    %v476 = vunpack.c.l.b16 %v235
    %v477 = vunpack.c.h.b16 %v235
    %v478 = vunpack.c.l.b16 %v236
    %v479 = vunpack.c.h.b16 %v236
    %v480 = vunpack.c.l.b16 %v237
    %v481 = vunpack.c.h.b16 %v237
    %v482 = vunpack.c.l.b16 %v238
    %v483 = vunpack.c.h.b16 %v238
    %v484 = vunpack.c.l.b16 %v239
    %v485 = vunpack.c.h.b16 %v239
    %v486 = vunpack.c.l.b16 %v240
    %v487 = vunpack.c.h.b16 %v240
    %v488 = vunpack.c.l.b16 %v241
    %v489 = vunpack.c.h.b16 %v241
    %v490 = vunpack.c.l.b16 %v242
    %v491 = vunpack.c.h.b16 %v242
    %v492 = vunpack.c.l.b16 %v243
    %v493 = vunpack.c.h.b16 %v243
    %v494 = vunpack.c.l.b16 %v244
    %v495 = vunpack.c.h.b16 %v244
    %v496 = vunpack.c.l.b16 %v245
    %v497 = vunpack.c.h.b16 %v245
    %v498 = vunpack.c.l.b16 %v246
    %v499 = vunpack.c.h.b16 %v246
    %v500 = vunpack.c.l.b16 %v247
    %v501 = vunpack.c.h.b16 %v247
    %v502 = vunpack.c.l.b16 %v248
    %v503 = vunpack.c.h.b16 %v248
    %v504 = vunpack.c.l.b16 %v249
    %v505 = vunpack.c.h.b16 %v249
    %v506 = vunpack.c.l.b16 %v250
    %v507 = vunpack.c.h.b16 %v250
    %v508 = vunpack.c.l.b16 %v251
    %v509 = vunpack.c.h.b16 %v251
    %v510 = vunpack.c.l.b16 %v252
    %v511 = vunpack.c.h.b16 %v252
    %v512 = vunpack.c.l.b16 %v253
    %v513 = vunpack.c.h.b16 %v253
    %v514 = vunpack.c.l.b16 %v254
    %v515 = vunpack.c.h.b16 %v254
    %v516 = vunpack.c.l.b16 %v255
    %v517 = vunpack.c.h.b16 %v255
    %v518 = vunpack.c.l.b16 %v256
    %v519 = vunpack.c.h.b16 %v256
    %v520 = vunpack.c.l.b16 %v257
    %v521 = vunpack.c.h.b16 %v257
    %v522 = vunpack.c.l.b16 %v258
    %v523 = vunpack.c.h.b16 %v258
    %v524 = vunpack.c.l.b16 %v259
    %v525 = vunpack.c.h.b16 %v259
    %v526 = vunpack.c.l.b16 %v260
    %v527 = vunpack.c.h.b16 %v260
    %v528 = vunpack.c.l.b16 %v261
    %v529 = vunpack.c.h.b16 %v261
    %v530 = vunpack.c.l.b16 %v262
    %v531 = vunpack.c.h.b16 %v262
    %v532 = vunpack.c.l.b16 %v263
    %v533 = vunpack.c.h.b16 %v263
    %v534 = vunpack.c.l.b16 %v264
    %v535 = vunpack.c.h.b16 %v264
    %v536 = vunpack.c.l.b16 %v265
    %v537 = vunpack.c.h.b16 %v265
    %v538 = vunpack.c.l.b16 %v266
    %v539 = vunpack.c.h.b16 %v266
    %v540 = vunpack.c.l.b16 %v267
    %v541 = vunpack.c.h.b16 %v267
    %v542 = vunpack.c.l.b16 %v268
    %v543 = vunpack.c.h.b16 %v268
    %v544 = vunpack.c.l.b16 %v269
    %v545 = vunpack.c.h.b16 %v269
    %v546 = vunpack.c.l.b16 %v270
    %v547 = vunpack.c.h.b16 %v270
    %v548 = vunpack.c.l.b16 %v271
    %v549 = vunpack.c.h.b16 %v271
    %v550 = vunpack.c.l.b16 %v272
    %v551 = vunpack.c.h.b16 %v272
    %v552 = vunpack.c.l.b16 %v273
    %v553 = vunpack.c.h.b16 %v273
    %v554 = vunpack.c.l.b16 %v274
    %v555 = vunpack.c.h.b16 %v274
    %v556 = vunpack.c.l.b16 %v275
    %v557 = vunpack.c.h.b16 %v275
    %v558 = vunpack.c.l.b16 %v276
    %v559 = vunpack.c.h.b16 %v276
    %v560 = vunpack.c.l.b16 %v277
    %v561 = vunpack.c.h.b16 %v277
    %v562 = vunpack.c.l.b16 %v278
    %v563 = vunpack.c.h.b16 %v278
    %v564 = vunpack.c.l.b16 %v279
    %v565 = vunpack.c.h.b16 %v279
    %v566 = vunpack.c.l.b16 %v280
    %v567 = vunpack.c.h.b16 %v280
    %v568 = vunpack.c.l.b16 %v281
    %v569 = vunpack.c.h.b16 %v281
    %v570 = vunpack.c.l.b16 %v282
    %v571 = vunpack.c.h.b16 %v282
    %v572 = vunpack.c.l.b16 %v283
    %v573 = vunpack.c.h.b16 %v283
    %v574 = vunpack.c.l.b16 %v284
    %v575 = vunpack.c.h.b16 %v284
    %v576 = vunpack.c.l.b16 %v285
    %v577 = vunpack.c.h.b16 %v285
    %v578 = vunpack.c.l.b16 %v286
    %v579 = vunpack.c.h.b16 %v286
    %v580 = vunpack.c.l.b16 %v287
    %v581 = vunpack.c.h.b16 %v287
    %v582 = vunpack.c.l.b16 %v288
    %v583 = vunpack.c.h.b16 %v288
    %v584 = vunpack.c.l.b16 %v289
    %v585 = vunpack.c.h.b16 %v289
    %v586 = vunpack.c.l.b16 %v290
    %v587 = vunpack.c.h.b16 %v290
    %v588 = vunpack.c.l.b16 %v291
    %v589 = vunpack.c.h.b16 %v291
    %v590 = vunpack.c.l.b16 %v292
    %v591 = vunpack.c.h.b16 %v292
    %v592 = vunpack.c.l.b16 %v293
    %v593 = vunpack.c.h.b16 %v293
    %v594 = vunpack.c.l.b16 %v294
    %v595 = vunpack.c.h.b16 %v294
    %v596 = vunpack.c.l.b16 %v295
    %v597 = vunpack.c.h.b16 %v295
    %v598 = vunpack.c.l.b16 %v296
    %v599 = vunpack.c.h.b16 %v296
    %v600 = vunpack.c.l.b16 %v297
    %v601 = vunpack.c.h.b16 %v297
    %v602 = vunpack.c.l.b16 %v298
    %v603 = vunpack.c.h.b16 %v298
    %v604 = vunpack.c.l.b16 %v299
    %v605 = vunpack.c.h.b16 %v299
    %v606 = vpack.c.b16 %v412, %v410
    %v607 = vpack.c.b16 %v413, %v411
    %v608 = vpack.c.b16 %v416, %v414
    %v609 = vpack.c.b16 %v417, %v415
    %v610 = vpack.c.b16 %v420, %v418
    %v611 = vpack.c.b16 %v421, %v419
    %v612 = vpack.c.b16 %v424, %v422
    %v613 = vpack.c.b16 %v425, %v423
    %v614 = vpack.c.b16 %v428, %v426
    %v615 = vpack.c.b16 %v429, %v427
    %v616 = vpack.c.b16 %v432, %v430
    %v617 = vpack.c.b16 %v433, %v431
    %v618 = vpack.c.b16 %v436, %v434
    %v619 = vpack.c.b16 %v437, %v435
    %v620 = vpack.c.b16 %v440, %v438
    %v621 = vpack.c.b16 %v441, %v439
    %v622 = vpack.c.b16 %v444, %v442
    %v623 = vpack.c.b16 %v445, %v443
    %v624 = vpack.c.b16 %v448, %v446
    %v625 = vpack.c.b16 %v449, %v447
    %v626 = vpack.c.b16 %v452, %v450
    %v627 = vpack.c.b16 %v453, %v451
    %v628 = vpack.c.b16 %v456, %v454
    %v629 = vpack.c.b16 %v457, %v455
    %v630 = vpack.c.b16 %v460, %v458
    %v631 = vpack.c.b16 %v461, %v459
    %v632 = vpack.c.b16 %v464, %v462
    %v633 = vpack.c.b16 %v465, %v463
    %v634 = vpack.c.b16 %v468, %v466
    %v635 = vpack.c.b16 %v469, %v467
    %v636 = vpack.c.b16 %v472, %v470
    %v637 = vpack.c.b16 %v473, %v471
    %v638 = vpack.c.b16 %v476, %v474
    %v639 = vpack.c.b16 %v477, %v475
    %v640 = vpack.c.b16 %v480, %v478
    %v641 = vpack.c.b16 %v481, %v479
    %v642 = vpack.c.b16 %v484, %v482
    %v643 = vpack.c.b16 %v485, %v483
    %v644 = vpack.c.b16 %v488, %v486
    %v645 = vpack.c.b16 %v489, %v487
    %v646 = vpack.c.b16 %v492, %v490
    %v647 = vpack.c.b16 %v493, %v491
    %v648 = vpack.c.b16 %v496, %v494
    %v649 = vpack.c.b16 %v497, %v495
    %v650 = vpack.c.b16 %v500, %v498
    %v651 = vpack.c.b16 %v501, %v499
    %v652 = vpack.c.b16 %v504, %v502
    %v653 = vpack.c.b16 %v505, %v503
    %v654 = vpack.c.b16 %v508, %v506
    %v655 = vpack.c.b16 %v509, %v507
    %v656 = vpack.c.b16 %v512, %v510
    %v657 = vpack.c.b16 %v513, %v511
    %v658 = vpack.c.b16 %v516, %v514
    %v659 = vpack.c.b16 %v517, %v515
    %v660 = vpack.c.b16 %v520, %v518
    %v661 = vpack.c.b16 %v521, %v519
    %v662 = vpack.c.b16 %v524, %v522
    %v663 = vpack.c.b16 %v525, %v523
    %v664 = vpack.c.b16 %v528, %v526
    %v665 = vpack.c.b16 %v529, %v527
    %v666 = vpack.c.b16 %v532, %v530
    %v667 = vpack.c.b16 %v533, %v531
    %v668 = vpack.c.b16 %v536, %v534
    %v669 = vpack.c.b16 %v537, %v535
    %v670 = vpack.c.b16 %v540, %v538
    %v671 = vpack.c.b16 %v541, %v539
    %v672 = vpack.c.b16 %v544, %v542
    %v673 = vpack.c.b16 %v545, %v543
    %v674 = vpack.c.b16 %v548, %v546
    %v675 = vpack.c.b16 %v549, %v547
    %v676 = vpack.c.b16 %v552, %v550
    %v677 = vpack.c.b16 %v553, %v551
    %v678 = vpack.c.b16 %v556, %v554
    %v679 = vpack.c.b16 %v557, %v555
    %v680 = vpack.c.b16 %v560, %v558
    %v681 = vpack.c.b16 %v561, %v559
    %v682 = vpack.c.b16 %v564, %v562
    %v683 = vpack.c.b16 %v565, %v563
    %v684 = vpack.c.b16 %v568, %v566
    %v685 = vpack.c.b16 %v569, %v567
    %v686 = vpack.c.b16 %v572, %v570
    %v687 = vpack.c.b16 %v573, %v571
    %v688 = vpack.c.b16 %v576, %v574
    %v689 = vpack.c.b16 %v577, %v575
    %v690 = vpack.c.b16 %v580, %v578
    %v691 = vpack.c.b16 %v581, %v579
    %v692 = vpack.c.b16 %v584, %v582
    %v693 = vpack.c.b16 %v585, %v583
    %v694 = vpack.c.b16 %v588, %v586
    %v695 = vpack.c.b16 %v589, %v587
    %v696 = vpack.c.b16 %v592, %v590
    %v697 = vpack.c.b16 %v593, %v591
    %v698 = vpack.c.b16 %v596, %v594
    %v699 = vpack.c.b16 %v597, %v595
    %v700 = vpack.c.b16 %v600, %v598
    %v701 = vpack.c.b16 %v601, %v599
    %v702 = vpack.c.b16 %v604, %v602
    %v703 = vpack.c.b16 %v605, %v603
    %vm802 = vcmask 130048
    %v804 = vsel %vm802, %v152, 0
    %v807 = vsel %vm802, %v159, 0
    %v810 = vsel %vm802, %v166, 0
    %v813 = vsel %vm802, %v173, 0
    %v816 = vsel %vm802, %v180, 0
    %v819 = vsel %vm802, %v187, 0
    %v822 = vsel %vm802, %v194, 0
    %v825 = vsel %vm802, %v201, 0
    %827 = vmatprep.subr.bf16.mxu0 %v607
    %828 = vmatpush1.bf16.msra.mxu0 %v606
    %829 = vmatprep.subr.bf16.mxu0 %v609
    %830 = vmatpush1.bf16.msra.mxu0 %v608
    %831 = vmatprep.subr.bf16.mxu0 %v611
    %832 = vmatpush1.bf16.msra.mxu0 %v610
    %833 = vmatprep.subr.bf16.mxu0 %v613
    %834 = vmatpush1.bf16.msra.mxu0 %v612
    %835 = vmatprep.subr.bf16.mxu0 %v615
    %836 = vmatpush1.bf16.msra.mxu0 %v614
    %837 = vmatprep.subr.bf16.mxu0 %v617
    %838 = vmatpush1.bf16.msra.mxu0 %v616
    %839 = vmatprep.subr.bf16.mxu0 %v619
    %840 = vmatpush1.bf16.msra.mxu0 %v618
    %841 = vmatprep.subr.bf16.mxu0 %v621
    %842 = vmatpush1.bf16.msra.mxu0 %v620
    %843 = vmatprep.subr.bf16.mxu0 %v623
    %844 = vmatpush1.bf16.msra.mxu0 %v622
    %845 = vmatprep.subr.bf16.mxu0 %v625
    %846 = vmatpush1.bf16.msra.mxu0 %v624
    %847 = vmatprep.subr.bf16.mxu0 %v627
    %848 = vmatpush1.bf16.msra.mxu0 %v626
    %849 = vmatprep.subr.bf16.mxu0 %v629
    %850 = vmatpush1.bf16.msra.mxu0 %v628
    %851 = vmatprep.subr.bf16.mxu0 %v631
    %852 = vmatpush1.bf16.msra.mxu0 %v630
    %853 = vmatprep.subr.bf16.mxu0 %v633
    %854 = vmatpush1.bf16.msra.mxu0 %v632
    %855 = vmatprep.subr.bf16.mxu0 %v635
    %856 = vmatpush1.bf16.msra.mxu0 %v634
    %857 = vmatprep.subr.bf16.mxu0 %v637
    %858 = vmatpush1.bf16.msra.mxu0 %v636
    %859 = vmatprep.mubr.bf16.mxu0 %v147
    %860 = vmatmul.mubr.bf16.gmra.mrb[0].mxu0 %v146
    %v861 = vpop.f32.mrb[0].mxu0
    %v862 = vadd.f32 %v305, %v861
    %v863 = vpop.f32.mrb[0].mxu0
    %v864 = vadd.f32 %v309, %v863
    %v865 = vpop.f32.mrb[0].mxu0
    %v866 = vadd.f32 %v305, %v865
    %v867 = vpop.f32.mrb[0].mxu0
    %v868 = vadd.f32 %v309, %v867
    %869 = vmatprep.mubr.bf16.mxu0 %v154
    %870 = vmatmul.mubr.bf16.gmra.mrb[0].mxu0 %v153
    %v871 = vpop.f32.mrb[0].mxu0
    %v872 = vadd.f32 %v305, %v871
    %v873 = vpop.f32.mrb[0].mxu0
    %v874 = vadd.f32 %v309, %v873
    %v875 = vpop.f32.mrb[0].mxu0
    %v876 = vadd.f32 %v305, %v875
    %v877 = vpop.f32.mrb[0].mxu0
    %v878 = vadd.f32 %v309, %v877
    %879 = vmatprep.mubr.bf16.mxu0 %v161
    %880 = vmatmul.mubr.bf16.gmra.mrb[0].mxu0 %v160
    %v881 = vpop.f32.mrb[0].mxu0
    %v882 = vadd.f32 %v305, %v881
    %v883 = vpop.f32.mrb[0].mxu0
    %v884 = vadd.f32 %v309, %v883
    %v885 = vpop.f32.mrb[0].mxu0
    %v886 = vadd.f32 %v305, %v885
    %v887 = vpop.f32.mrb[0].mxu0
    %v888 = vadd.f32 %v309, %v887
    %889 = vmatprep.mubr.bf16.mxu0 %v168
    %890 = vmatmul.mubr.bf16.gmra.mrb[0].mxu0 %v167
    %v891 = vpop.f32.mrb[0].mxu0
    %v892 = vadd.f32 %v305, %v891
    %v893 = vpop.f32.mrb[0].mxu0
    %v894 = vadd.f32 %v309, %v893
    %v895 = vpop.f32.mrb[0].mxu0
    %v896 = vadd.f32 %v305, %v895
    %v897 = vpop.f32.mrb[0].mxu0
    %v898 = vadd.f32 %v309, %v897
    %899 = vmatprep.mubr.bf16.mxu0 %v175
    %900 = vmatmul.mubr.bf16.gmra.mrb[0].mxu0 %v174
    %v901 = vpop.f32.mrb[0].mxu0
    %v902 = vadd.f32 %v305, %v901
    %v903 = vpop.f32.mrb[0].mxu0
    %v904 = vadd.f32 %v309, %v903
    %v905 = vpop.f32.mrb[0].mxu0
    %v906 = vadd.f32 %v305, %v905
    %v907 = vpop.f32.mrb[0].mxu0
    %v908 = vadd.f32 %v309, %v907
    %909 = vmatprep.mubr.bf16.mxu0 %v182
    %910 = vmatmul.mubr.bf16.gmra.mrb[0].mxu0 %v181
    %v911 = vpop.f32.mrb[0].mxu0
    %v912 = vadd.f32 %v305, %v911
    %v913 = vpop.f32.mrb[0].mxu0
    %v914 = vadd.f32 %v309, %v913
    %v915 = vpop.f32.mrb[0].mxu0
    %v916 = vadd.f32 %v305, %v915
    %v917 = vpop.f32.mrb[0].mxu0
    %v918 = vadd.f32 %v309, %v917
    %919 = vmatprep.mubr.bf16.mxu0 %v189
    %920 = vmatmul.mubr.bf16.gmra.mrb[0].mxu0 %v188
    %v921 = vpop.f32.mrb[0].mxu0
    %v922 = vadd.f32 %v305, %v921
    %v923 = vpop.f32.mrb[0].mxu0
    %v924 = vadd.f32 %v309, %v923
    %v925 = vpop.f32.mrb[0].mxu0
    %v926 = vadd.f32 %v305, %v925
    %v927 = vpop.f32.mrb[0].mxu0
    %v928 = vadd.f32 %v309, %v927
    %929 = vmatprep.mubr.bf16.mxu0 %v196
    %930 = vmatmul.mubr.bf16.gmra.mrb[0].mxu0 %v195
    %v931 = vpop.f32.mrb[0].mxu0
    %v932 = vadd.f32 %v305, %v931
    %v933 = vpop.f32.mrb[0].mxu0
    %v934 = vadd.f32 %v309, %v933
    %v935 = vpop.f32.mrb[0].mxu0
    %v936 = vadd.f32 %v305, %v935
    %v937 = vpop.f32.mrb[0].mxu0
    %v938 = vadd.f32 %v309, %v937
    %939 = vdwg.mxu0
    %940 = vmatprep.subr.bf16.mxu0 %v639
    %941 = vmatpush1.bf16.msra.mxu0 %v638
    %942 = vmatprep.subr.bf16.mxu0 %v641
    %943 = vmatpush1.bf16.msra.mxu0 %v640
    %944 = vmatprep.subr.bf16.mxu0 %v643
    %945 = vmatpush1.bf16.msra.mxu0 %v642
    %946 = vmatprep.subr.bf16.mxu0 %v645
    %947 = vmatpush1.bf16.msra.mxu0 %v644
    %948 = vmatprep.subr.bf16.mxu0 %v647
    %949 = vmatpush1.bf16.msra.mxu0 %v646
    %950 = vmatprep.subr.bf16.mxu0 %v649
    %951 = vmatpush1.bf16.msra.mxu0 %v648
    %952 = vmatprep.subr.bf16.mxu0 %v651
    %953 = vmatpush1.bf16.msra.mxu0 %v650
    %954 = vmatprep.subr.bf16.mxu0 %v653
    %955 = vmatpush1.bf16.msra.mxu0 %v652
    %956 = vmatprep.subr.bf16.mxu0 %v655
    %957 = vmatpush1.bf16.msra.mxu0 %v654
    %958 = vmatprep.subr.bf16.mxu0 %v657
    %959 = vmatpush1.bf16.msra.mxu0 %v656
    %960 = vmatprep.subr.bf16.mxu0 %v659
    %961 = vmatpush1.bf16.msra.mxu0 %v658
    %962 = vmatprep.subr.bf16.mxu0 %v661
    %963 = vmatpush1.bf16.msra.mxu0 %v660
    %964 = vmatprep.subr.bf16.mxu0 %v663
    %965 = vmatpush1.bf16.msra.mxu0 %v662
    %966 = vmatprep.subr.bf16.mxu0 %v665
    %967 = vmatpush1.bf16.msra.mxu0 %v664
    %968 = vmatprep.subr.bf16.mxu0 %v667
    %969 = vmatpush1.bf16.msra.mxu0 %v666
    %970 = vmatprep.subr.bf16.mxu0 %v669
    %971 = vmatpush1.bf16.msra.mxu0 %v668
    %972 = vmatprep.mubr.bf16.mxu0 %v149
    %973 = vmatmul.mubr.bf16.gmra.mrb[0].mxu0 %v148
    %v974 = vpop.f32.mrb[0].mxu0
    %v975 = vadd.f32 %v862, %v974
    %v976 = vpop.f32.mrb[0].mxu0
    %v977 = vadd.f32 %v864, %v976
    %v978 = vpop.f32.mrb[0].mxu0
    %v979 = vadd.f32 %v866, %v978
    %v980 = vpop.f32.mrb[0].mxu0
    %v981 = vadd.f32 %v868, %v980
    %982 = vmatprep.mubr.bf16.mxu0 %v156
    %983 = vmatmul.mubr.bf16.gmra.mrb[0].mxu0 %v155
    %v984 = vpop.f32.mrb[0].mxu0
    %v985 = vadd.f32 %v872, %v984
    %v986 = vpop.f32.mrb[0].mxu0
    %v987 = vadd.f32 %v874, %v986
    %v988 = vpop.f32.mrb[0].mxu0
    %v989 = vadd.f32 %v876, %v988
    %v990 = vpop.f32.mrb[0].mxu0
    %v991 = vadd.f32 %v878, %v990
    %992 = vmatprep.mubr.bf16.mxu0 %v163
    %993 = vmatmul.mubr.bf16.gmra.mrb[0].mxu0 %v162
    %v994 = vpop.f32.mrb[0].mxu0
    %v995 = vadd.f32 %v882, %v994
    %v996 = vpop.f32.mrb[0].mxu0
    %v997 = vadd.f32 %v884, %v996
    %v998 = vpop.f32.mrb[0].mxu0
    %v999 = vadd.f32 %v886, %v998
    %v1000 = vpop.f32.mrb[0].mxu0
    %v1001 = vadd.f32 %v888, %v1000
    %1002 = vmatprep.mubr.bf16.mxu0 %v170
    %1003 = vmatmul.mubr.bf16.gmra.mrb[0].mxu0 %v169
    %v1004 = vpop.f32.mrb[0].mxu0
    %v1005 = vadd.f32 %v892, %v1004
    %v1006 = vpop.f32.mrb[0].mxu0
    %v1007 = vadd.f32 %v894, %v1006
    %v1008 = vpop.f32.mrb[0].mxu0
    %v1009 = vadd.f32 %v896, %v1008
    %v1010 = vpop.f32.mrb[0].mxu0
    %v1011 = vadd.f32 %v898, %v1010
    %1012 = vmatprep.mubr.bf16.mxu0 %v177
    %1013 = vmatmul.mubr.bf16.gmra.mrb[0].mxu0 %v176
    %v1014 = vpop.f32.mrb[0].mxu0
    %v1015 = vadd.f32 %v902, %v1014
    %v1016 = vpop.f32.mrb[0].mxu0
    %v1017 = vadd.f32 %v904, %v1016
    %v1018 = vpop.f32.mrb[0].mxu0
    %v1019 = vadd.f32 %v906, %v1018
    %v1020 = vpop.f32.mrb[0].mxu0
    %v1021 = vadd.f32 %v908, %v1020
    %1022 = vmatprep.mubr.bf16.mxu0 %v184
    %1023 = vmatmul.mubr.bf16.gmra.mrb[0].mxu0 %v183
    %v1024 = vpop.f32.mrb[0].mxu0
    %v1025 = vadd.f32 %v912, %v1024
    %v1026 = vpop.f32.mrb[0].mxu0
    %v1027 = vadd.f32 %v914, %v1026
    %v1028 = vpop.f32.mrb[0].mxu0
    %v1029 = vadd.f32 %v916, %v1028
    %v1030 = vpop.f32.mrb[0].mxu0
    %v1031 = vadd.f32 %v918, %v1030
    %1032 = vmatprep.mubr.bf16.mxu0 %v191
    %1033 = vmatmul.mubr.bf16.gmra.mrb[0].mxu0 %v190
    %v1034 = vpop.f32.mrb[0].mxu0
    %v1035 = vadd.f32 %v922, %v1034
    %v1036 = vpop.f32.mrb[0].mxu0
    %v1037 = vadd.f32 %v924, %v1036
    %v1038 = vpop.f32.mrb[0].mxu0
    %v1039 = vadd.f32 %v926, %v1038
    %v1040 = vpop.f32.mrb[0].mxu0
    %v1041 = vadd.f32 %v928, %v1040
    %1042 = vmatprep.mubr.bf16.mxu0 %v198
    %1043 = vmatmul.mubr.bf16.gmra.mrb[0].mxu0 %v197
    %v1044 = vpop.f32.mrb[0].mxu0
    %v1045 = vadd.f32 %v932, %v1044
    %v1046 = vpop.f32.mrb[0].mxu0
    %v1047 = vadd.f32 %v934, %v1046
    %v1048 = vpop.f32.mrb[0].mxu0
    %v1049 = vadd.f32 %v936, %v1048
    %v1050 = vpop.f32.mrb[0].mxu0
    %v1051 = vadd.f32 %v938, %v1050
    %1052 = vdwg.mxu0
    %1053 = vmatprep.subr.bf16.mxu0 %v671
    %1054 = vmatpush1.bf16.msra.mxu0 %v670
    %1055 = vmatprep.subr.bf16.mxu0 %v673
    %1056 = vmatpush1.bf16.msra.mxu0 %v672
    %1057 = vmatprep.subr.bf16.mxu0 %v675
    %1058 = vmatpush1.bf16.msra.mxu0 %v674
    %1059 = vmatprep.subr.bf16.mxu0 %v677
    %1060 = vmatpush1.bf16.msra.mxu0 %v676
    %1061 = vmatprep.subr.bf16.mxu0 %v679
    %1062 = vmatpush1.bf16.msra.mxu0 %v678
    %1063 = vmatprep.subr.bf16.mxu0 %v681
    %1064 = vmatpush1.bf16.msra.mxu0 %v680
    %1065 = vmatprep.subr.bf16.mxu0 %v683
    %1066 = vmatpush1.bf16.msra.mxu0 %v682
    %1067 = vmatprep.subr.bf16.mxu0 %v685
    %1068 = vmatpush1.bf16.msra.mxu0 %v684
    %1069 = vmatprep.subr.bf16.mxu0 %v687
    %1070 = vmatpush1.bf16.msra.mxu0 %v686
    %1071 = vmatprep.subr.bf16.mxu0 %v689
    %1072 = vmatpush1.bf16.msra.mxu0 %v688
    %1073 = vmatprep.subr.bf16.mxu0 %v691
    %1074 = vmatpush1.bf16.msra.mxu0 %v690
    %1075 = vmatprep.subr.bf16.mxu0 %v693
    %1076 = vmatpush1.bf16.msra.mxu0 %v692
    %1077 = vmatprep.subr.bf16.mxu0 %v695
    %1078 = vmatpush1.bf16.msra.mxu0 %v694
    %1079 = vmatprep.subr.bf16.mxu0 %v697
    %1080 = vmatpush1.bf16.msra.mxu0 %v696
    %1081 = vmatprep.subr.bf16.mxu0 %v699
    %1082 = vmatpush1.bf16.msra.mxu0 %v698
    %1083 = vmatprep.subr.bf16.mxu0 %v701
    %1084 = vmatpush1.bf16.msra.mxu0 %v700
    %1085 = vmatprep.mubr.bf16.mxu0 %v151
    %1086 = vmatmul.mubr.bf16.gmra.mrb[0].mxu0 %v150
    %v1087 = vpop.f32.mrb[0].mxu0
    %v1088 = vadd.f32 %v975, %v1087
    %v1089 = vpop.f32.mrb[0].mxu0
    %v1090 = vadd.f32 %v977, %v1089
    %v1091 = vpop.f32.mrb[0].mxu0
    %v1092 = vadd.f32 %v979, %v1091
    %v1093 = vpop.f32.mrb[0].mxu0
    %v1094 = vadd.f32 %v981, %v1093
    %1095 = vmatprep.mubr.bf16.mxu0 %v158
    %1096 = vmatmul.mubr.bf16.gmra.mrb[0].mxu0 %v157
    %v1097 = vpop.f32.mrb[0].mxu0
    %v1098 = vadd.f32 %v985, %v1097
    %v1099 = vpop.f32.mrb[0].mxu0
    %v1100 = vadd.f32 %v987, %v1099
    %v1101 = vpop.f32.mrb[0].mxu0
    %v1102 = vadd.f32 %v989, %v1101
    %v1103 = vpop.f32.mrb[0].mxu0
    %v1104 = vadd.f32 %v991, %v1103
    %1105 = vmatprep.mubr.bf16.mxu0 %v165
    %1106 = vmatmul.mubr.bf16.gmra.mrb[0].mxu0 %v164
    %v1107 = vpop.f32.mrb[0].mxu0
    %v1108 = vadd.f32 %v995, %v1107
    %v1109 = vpop.f32.mrb[0].mxu0
    %v1110 = vadd.f32 %v997, %v1109
    %v1111 = vpop.f32.mrb[0].mxu0
    %v1112 = vadd.f32 %v999, %v1111
    %v1113 = vpop.f32.mrb[0].mxu0
    %v1114 = vadd.f32 %v1001, %v1113
    %1115 = vmatprep.mubr.bf16.mxu0 %v172
    %1116 = vmatmul.mubr.bf16.gmra.mrb[0].mxu0 %v171
    %v1117 = vpop.f32.mrb[0].mxu0
    %v1118 = vadd.f32 %v1005, %v1117
    %v1119 = vpop.f32.mrb[0].mxu0
    %v1120 = vadd.f32 %v1007, %v1119
    %v1121 = vpop.f32.mrb[0].mxu0
    %v1122 = vadd.f32 %v1009, %v1121
    %v1123 = vpop.f32.mrb[0].mxu0
    %v1124 = vadd.f32 %v1011, %v1123
    %1125 = vmatprep.mubr.bf16.mxu0 %v179
    %1126 = vmatmul.mubr.bf16.gmra.mrb[0].mxu0 %v178
    %v1127 = vpop.f32.mrb[0].mxu0
    %v1128 = vadd.f32 %v1015, %v1127
    %v1129 = vpop.f32.mrb[0].mxu0
    %v1130 = vadd.f32 %v1017, %v1129
    %v1131 = vpop.f32.mrb[0].mxu0
    %v1132 = vadd.f32 %v1019, %v1131
    %v1133 = vpop.f32.mrb[0].mxu0
    %v1134 = vadd.f32 %v1021, %v1133
    %1135 = vmatprep.mubr.bf16.mxu0 %v186
    %1136 = vmatmul.mubr.bf16.gmra.mrb[0].mxu0 %v185
    %v1137 = vpop.f32.mrb[0].mxu0
    %v1138 = vadd.f32 %v1025, %v1137
    %v1139 = vpop.f32.mrb[0].mxu0
    %v1140 = vadd.f32 %v1027, %v1139
    %v1141 = vpop.f32.mrb[0].mxu0
    %v1142 = vadd.f32 %v1029, %v1141
    %v1143 = vpop.f32.mrb[0].mxu0
    %v1144 = vadd.f32 %v1031, %v1143
    %1145 = vmatprep.mubr.bf16.mxu0 %v193
    %1146 = vmatmul.mubr.bf16.gmra.mrb[0].mxu0 %v192
    %v1147 = vpop.f32.mrb[0].mxu0
    %v1148 = vadd.f32 %v1035, %v1147
    %v1149 = vpop.f32.mrb[0].mxu0
    %v1150 = vadd.f32 %v1037, %v1149
    %v1151 = vpop.f32.mrb[0].mxu0
    %v1152 = vadd.f32 %v1039, %v1151
    %v1153 = vpop.f32.mrb[0].mxu0
    %v1154 = vadd.f32 %v1041, %v1153
    %1155 = vmatprep.mubr.bf16.mxu0 %v200
    %1156 = vmatmul.mubr.bf16.gmra.mrb[0].mxu0 %v199
    %v1157 = vpop.f32.mrb[0].mxu0
    %v1158 = vadd.f32 %v1045, %v1157
    %v1159 = vpop.f32.mrb[0].mxu0
    %v1160 = vadd.f32 %v1047, %v1159
    %v1161 = vpop.f32.mrb[0].mxu0
    %v1162 = vadd.f32 %v1049, %v1161
    %v1163 = vpop.f32.mrb[0].mxu0
    %v1164 = vadd.f32 %v1051, %v1163
    %1165 = vdwg.mxu0
    %1166 = vmatprep.subr.bf16.mxu0 %v703
    %1167 = vmatpush1.bf16.msra.mxu0 %v702
    %1168 = vmatprep.subr.bf16.mxu0 0
    %1169 = vmatpush1.bf16.msra.mxu0 0
    %1170 = vmatprep.subr.bf16.mxu0 0
    %1171 = vmatpush1.bf16.msra.mxu0 0
    %1172 = vmatprep.subr.bf16.mxu0 0
    %1173 = vmatpush1.bf16.msra.mxu0 0
    %1174 = vmatprep.subr.bf16.mxu0 0
    %1175 = vmatpush1.bf16.msra.mxu0 0
    %1176 = vmatprep.subr.bf16.mxu0 0
    %1177 = vmatpush1.bf16.msra.mxu0 0
    %1178 = vmatprep.subr.bf16.mxu0 0
    %1179 = vmatpush1.bf16.msra.mxu0 0
    %1180 = vmatprep.subr.bf16.mxu0 0
    %1181 = vmatpush1.bf16.msra.mxu0 0
    %1182 = vmatprep.subr.bf16.mxu0 0
    %1183 = vmatpush1.bf16.msra.mxu0 0
    %1184 = vmatprep.subr.bf16.mxu0 0
    %1185 = vmatpush1.bf16.msra.mxu0 0
    %1186 = vmatprep.subr.bf16.mxu0 0
    %1187 = vmatpush1.bf16.msra.mxu0 0
    %1188 = vmatprep.subr.bf16.mxu0 0
    %1189 = vmatpush1.bf16.msra.mxu0 0
    %1190 = vmatprep.subr.bf16.mxu0 0
    %1191 = vmatpush1.bf16.msra.mxu0 0
    %1192 = vmatprep.subr.bf16.mxu0 0
    %1193 = vmatpush1.bf16.msra.mxu0 0
    %1194 = vmatprep.subr.bf16.mxu0 0
    %1195 = vmatpush1.bf16.msra.mxu0 0
    %1196 = vmatprep.subr.bf16.mxu0 0
    %1197 = vmatpush1.bf16.msra.mxu0 0
    %1198 = vmatprep.mubr.bf16.mxu0 0
    %1199 = vmatmul.mubr.bf16.gmra.mrb[0].mxu0 %v804
    %v1200 = vpop.f32.mrb[0].mxu0
    %v1201 = vadd.f32 %v1088, %v1200
    %v1202 = vpop.f32.mrb[0].mxu0
    %v1203 = vadd.f32 %v1090, %v1202
    %v1204 = vpop.f32.mrb[0].mxu0
    %v1205 = vadd.f32 %v1092, %v1204
    %v1206 = vpop.f32.mrb[0].mxu0
    %v1207 = vadd.f32 %v1094, %v1206
    %1208 = vmatprep.mubr.bf16.mxu0 0
    %1209 = vmatmul.mubr.bf16.gmra.mrb[0].mxu0 %v807
    %v1210 = vpop.f32.mrb[0].mxu0
    %v1211 = vadd.f32 %v1098, %v1210
    %v1212 = vpop.f32.mrb[0].mxu0
    %v1213 = vadd.f32 %v1100, %v1212
    %v1214 = vpop.f32.mrb[0].mxu0
    %v1215 = vadd.f32 %v1102, %v1214
    %v1216 = vpop.f32.mrb[0].mxu0
    %v1217 = vadd.f32 %v1104, %v1216
    %1218 = vmatprep.mubr.bf16.mxu0 0
    %1219 = vmatmul.mubr.bf16.gmra.mrb[0].mxu0 %v810
    %v1220 = vpop.f32.mrb[0].mxu0
    %v1221 = vadd.f32 %v1108, %v1220
    %v1222 = vpop.f32.mrb[0].mxu0
    %v1223 = vadd.f32 %v1110, %v1222
    %v1224 = vpop.f32.mrb[0].mxu0
    %v1225 = vadd.f32 %v1112, %v1224
    %v1226 = vpop.f32.mrb[0].mxu0
    %v1227 = vadd.f32 %v1114, %v1226
    %1228 = vmatprep.mubr.bf16.mxu0 0
    %1229 = vmatmul.mubr.bf16.gmra.mrb[0].mxu0 %v813
    %v1230 = vpop.f32.mrb[0].mxu0
    %v1231 = vadd.f32 %v1118, %v1230
    %v1232 = vpop.f32.mrb[0].mxu0
    %v1233 = vadd.f32 %v1120, %v1232
    %v1234 = vpop.f32.mrb[0].mxu0
    %v1235 = vadd.f32 %v1122, %v1234
    %v1236 = vpop.f32.mrb[0].mxu0
    %v1237 = vadd.f32 %v1124, %v1236
    %1238 = vmatprep.mubr.bf16.mxu0 0
    %1239 = vmatmul.mubr.bf16.gmra.mrb[0].mxu0 %v816
    %v1240 = vpop.f32.mrb[0].mxu0
    %v1241 = vadd.f32 %v1128, %v1240
    %v1242 = vpop.f32.mrb[0].mxu0
    %v1243 = vadd.f32 %v1130, %v1242
    %v1244 = vpop.f32.mrb[0].mxu0
    %v1245 = vadd.f32 %v1132, %v1244
    %v1246 = vpop.f32.mrb[0].mxu0
    %v1247 = vadd.f32 %v1134, %v1246
    %1248 = vmatprep.mubr.bf16.mxu0 0
    %1249 = vmatmul.mubr.bf16.gmra.mrb[0].mxu0 %v819
    %v1250 = vpop.f32.mrb[0].mxu0
    %v1251 = vadd.f32 %v1138, %v1250
    %v1252 = vpop.f32.mrb[0].mxu0
    %v1253 = vadd.f32 %v1140, %v1252
    %v1254 = vpop.f32.mrb[0].mxu0
    %v1255 = vadd.f32 %v1142, %v1254
    %v1256 = vpop.f32.mrb[0].mxu0
    %v1257 = vadd.f32 %v1144, %v1256
    %1258 = vmatprep.mubr.bf16.mxu0 0
    %1259 = vmatmul.mubr.bf16.gmra.mrb[0].mxu0 %v822
    %v1260 = vpop.f32.mrb[0].mxu0
    %v1261 = vadd.f32 %v1148, %v1260
    %v1262 = vpop.f32.mrb[0].mxu0
    %v1263 = vadd.f32 %v1150, %v1262
    %v1264 = vpop.f32.mrb[0].mxu0
    %v1265 = vadd.f32 %v1152, %v1264
    %v1266 = vpop.f32.mrb[0].mxu0
    %v1267 = vadd.f32 %v1154, %v1266
    %1268 = vmatprep.mubr.bf16.mxu0 0
    %1269 = vmatmul.mubr.bf16.gmra.mrb[0].mxu0 %v825
    %v1270 = vpop.f32.mrb[0].mxu0
    %v1271 = vadd.f32 %v1158, %v1270
    %v1272 = vpop.f32.mrb[0].mxu0
    %v1273 = vadd.f32 %v1160, %v1272
    %v1274 = vpop.f32.mrb[0].mxu0
    %v1275 = vadd.f32 %v1162, %v1274
    %v1276 = vpop.f32.mrb[0].mxu0
    %v1277 = vadd.f32 %v1164, %v1276
    %1278 = vdwg.mxu0
    %v1279 = vmax.f32 %v1201, 0.0
    %v1280 = vmax.f32 %v1203, 0.0
    %v1281 = vmax.f32 %v1205, 0.0
    %v1282 = vmax.f32 %v1207, 0.0
    %v1283 = vmax.f32 %v1211, 0.0
    %v1284 = vmax.f32 %v1213, 0.0
    %v1285 = vmax.f32 %v1215, 0.0
    %v1286 = vmax.f32 %v1217, 0.0
    %v1287 = vmax.f32 %v1221, 0.0
    %v1288 = vmax.f32 %v1223, 0.0
    %v1289 = vmax.f32 %v1225, 0.0
    %v1290 = vmax.f32 %v1227, 0.0
    %v1291 = vmax.f32 %v1231, 0.0
    %v1292 = vmax.f32 %v1233, 0.0
    %v1293 = vmax.f32 %v1235, 0.0
    %v1294 = vmax.f32 %v1237, 0.0
    %v1295 = vmax.f32 %v1241, 0.0
    %v1296 = vmax.f32 %v1243, 0.0
    %v1297 = vmax.f32 %v1245, 0.0
    %v1298 = vmax.f32 %v1247, 0.0
    %v1299 = vmax.f32 %v1251, 0.0
    %v1300 = vmax.f32 %v1253, 0.0
    %v1301 = vmax.f32 %v1255, 0.0
    %v1302 = vmax.f32 %v1257, 0.0
    %v1303 = vmax.f32 %v1261, 0.0
    %v1304 = vmax.f32 %v1263, 0.0
    %v1305 = vmax.f32 %v1265, 0.0
    %v1306 = vmax.f32 %v1267, 0.0
    %v1307 = vmax.f32 %v1271, 0.0
    %v1308 = vmax.f32 %v1273, 0.0
    %v1309 = vmax.f32 %v1275, 0.0
    %v1310 = vmax.f32 %v1277, 0.0
    %v1311 = vpack.c.bf16 %v1281, %v1279
    %v1312 = vpack.c.bf16 %v1282, %v1280
    %v1313 = vpack.c.bf16 %v1285, %v1283
    %v1314 = vpack.c.bf16 %v1286, %v1284
    %v1315 = vpack.c.bf16 %v1289, %v1287
    %v1316 = vpack.c.bf16 %v1290, %v1288
    %v1317 = vpack.c.bf16 %v1293, %v1291
    %v1318 = vpack.c.bf16 %v1294, %v1292
    %v1319 = vpack.c.bf16 %v1297, %v1295
    %v1320 = vpack.c.bf16 %v1298, %v1296
    %v1321 = vpack.c.bf16 %v1301, %v1299
    %v1322 = vpack.c.bf16 %v1302, %v1300
    %v1323 = vpack.c.bf16 %v1305, %v1303
    %v1324 = vpack.c.bf16 %v1306, %v1304
    %v1325 = vpack.c.bf16 %v1309, %v1307
    %v1326 = vpack.c.bf16 %v1310, %v1308
    %v1327 = vld [vmem:[%s3] sm:$0xf]
    %v1328 = vld [vmem:[%s3 + $0x4] sm:$0xf]
    %v1329 = vld [vmem:[%s3 + $0x8] sm:$0xf]
    %v1330 = vld [vmem:[%s3 + $0xc] sm:$0xf]
    %v1331 = vld [vmem:[%s3 + $0x10] sm:$0xf]
    %v1332 = vld [vmem:[%s3 + $0x14] sm:$0xf]
    %v1333 = vld [vmem:[%s3 + $0x18] sm:$0xf]
    %v1334 = vld [vmem:[%s3 + $0x1c] sm:$0xf]
    %v1335 = vld [vmem:[%s3 + $0x20] sm:$0xf]
    %v1336 = vld [vmem:[%s3 + $0x24] sm:$0xf]
    %v1337 = vld [vmem:[%s3 + $0x28] sm:$0xf]
    %v1338 = vld [vmem:[%s3 + $0x2c] sm:$0xf]
    %v1339 = vld [vmem:[%s3 + $0x30] sm:$0xf]
    %v1340 = vld [vmem:[%s3 + $0x34] sm:$0xf]
    %v1341 = vld [vmem:[%s3 + $0x38] sm:$0xf]
    %v1342 = vld [vmem:[%s3 + $0x3c] sm:$0xf]
    %v1343 = vld [vmem:[%s3 + $0x40] sm:$0xf]
    %v1344 = vld [vmem:[%s3 + $0x44] sm:$0xf]
    %v1345 = vld [vmem:[%s3 + $0x48] sm:$0xf]
    %v1346 = vld [vmem:[%s3 + $0x4c] sm:$0xf]
    %v1347 = vld [vmem:[%s3 + $0x50] sm:$0xf]
    %v1348 = vld [vmem:[%s3 + $0x54] sm:$0xf]
    %v1349 = vld [vmem:[%s3 + $0x58] sm:$0xf]
    %v1350 = vld [vmem:[%s3 + $0x5c] sm:$0xf]
    %v1351 = vld [vmem:[%s3 + $0x60] sm:$0xf]
    %v1352 = vld [vmem:[%s3 + $0x64] sm:$0xf]
    %v1353 = vld [vmem:[%s3 + $0x68] sm:$0xf]
    %v1354 = vld [vmem:[%s3 + $0x6c] sm:$0xf]
    %v1355 = vld [vmem:[%s3 + $0x70] sm:$0xf]
    %v1356 = vld [vmem:[%s3 + $0x74] sm:$0xf]
    %v1357 = vld [vmem:[%s3 + $0x78] sm:$0xf]
    %v1358 = vld [vmem:[%s3 + $0x7c] sm:$0xf]
    %v1359 = vld [vmem:[%s4] sm:$0x1]
    %v1361 = vlaneseq
    %v1362 = vshrl.u32 %v1361, 7
    %v1363 = vsub.s32 0, %v1362
    %v1364 = vrot.slane %v1359, %v1363
    %v1398 = vunpack.c.l.b16 %v1327
    %v1399 = vunpack.c.l.b16 %v1328
    %v1400 = vunpack.c.l.b16 %v1329
    %v1401 = vunpack.c.l.b16 %v1330
    %v1402 = vunpack.c.l.b16 %v1331
    %v1403 = vunpack.c.l.b16 %v1332
    %v1404 = vunpack.c.l.b16 %v1333
    %v1405 = vunpack.c.l.b16 %v1334
    %v1406 = vunpack.c.l.b16 %v1335
    %v1407 = vunpack.c.l.b16 %v1336
    %v1408 = vunpack.c.l.b16 %v1337
    %v1409 = vunpack.c.l.b16 %v1338
    %v1410 = vunpack.c.l.b16 %v1339
    %v1411 = vunpack.c.l.b16 %v1340
    %v1412 = vunpack.c.l.b16 %v1341
    %v1413 = vunpack.c.l.b16 %v1342
    %v1414 = vunpack.c.l.b16 %v1343
    %v1415 = vunpack.c.l.b16 %v1344
    %v1416 = vunpack.c.l.b16 %v1345
    %v1417 = vunpack.c.l.b16 %v1346
    %v1418 = vunpack.c.l.b16 %v1347
    %v1419 = vunpack.c.l.b16 %v1348
    %v1420 = vunpack.c.l.b16 %v1349
    %v1421 = vunpack.c.l.b16 %v1350
    %v1422 = vunpack.c.l.b16 %v1351
    %v1423 = vunpack.c.l.b16 %v1352
    %v1424 = vunpack.c.l.b16 %v1353
    %v1425 = vunpack.c.l.b16 %v1354
    %v1426 = vunpack.c.l.b16 %v1355
    %v1427 = vunpack.c.l.b16 %v1356
    %v1428 = vunpack.c.l.b16 %v1357
    %v1429 = vunpack.c.l.b16 %v1358
    %v1430 = vpack.c.b16 %v1399, %v1398
    %v1431 = vpack.c.b16 %v1401, %v1400
    %v1432 = vpack.c.b16 %v1403, %v1402
    %v1433 = vpack.c.b16 %v1405, %v1404
    %v1434 = vpack.c.b16 %v1407, %v1406
    %v1435 = vpack.c.b16 %v1409, %v1408
    %v1436 = vpack.c.b16 %v1411, %v1410
    %v1437 = vpack.c.b16 %v1413, %v1412
    %v1438 = vpack.c.b16 %v1415, %v1414
    %v1439 = vpack.c.b16 %v1417, %v1416
    %v1440 = vpack.c.b16 %v1419, %v1418
    %v1441 = vpack.c.b16 %v1421, %v1420
    %v1442 = vpack.c.b16 %v1423, %v1422
    %v1443 = vpack.c.b16 %v1425, %v1424
    %v1444 = vpack.c.b16 %v1427, %v1426
    %v1445 = vpack.c.b16 %v1429, %v1428
    %1462 = vmatprep.subr.bf16.mxu0 0
    %1463 = vmatpush1.bf16.msra.mxu0 %v1430
    %1464 = vmatprep.subr.bf16.mxu0 0
    %1465 = vmatpush1.bf16.msra.mxu0 %v1431
    %1466 = vmatprep.subr.bf16.mxu0 0
    %1467 = vmatpush1.bf16.msra.mxu0 %v1432
    %1468 = vmatprep.subr.bf16.mxu0 0
    %1469 = vmatpush1.bf16.msra.mxu0 %v1433
    %1470 = vmatprep.subr.bf16.mxu0 0
    %1471 = vmatpush1.bf16.msra.mxu0 %v1434
    %1472 = vmatprep.subr.bf16.mxu0 0
    %1473 = vmatpush1.bf16.msra.mxu0 %v1435
    %1474 = vmatprep.subr.bf16.mxu0 0
    %1475 = vmatpush1.bf16.msra.mxu0 %v1436
    %1476 = vmatprep.subr.bf16.mxu0 0
    %1477 = vmatpush1.bf16.msra.mxu0 %v1437
    %1478 = vmatprep.subr.bf16.mxu0 0
    %1479 = vmatpush1.bf16.msra.mxu0 %v1438
    %1480 = vmatprep.subr.bf16.mxu0 0
    %1481 = vmatpush1.bf16.msra.mxu0 %v1439
    %1482 = vmatprep.subr.bf16.mxu0 0
    %1483 = vmatpush1.bf16.msra.mxu0 %v1440
    %1484 = vmatprep.subr.bf16.mxu0 0
    %1485 = vmatpush1.bf16.msra.mxu0 %v1441
    %1486 = vmatprep.subr.bf16.mxu0 0
    %1487 = vmatpush1.bf16.msra.mxu0 %v1442
    %1488 = vmatprep.subr.bf16.mxu0 0
    %1489 = vmatpush1.bf16.msra.mxu0 %v1443
    %1490 = vmatprep.subr.bf16.mxu0 0
    %1491 = vmatpush1.bf16.msra.mxu0 %v1444
    %1492 = vmatprep.subr.bf16.mxu0 0
    %1493 = vmatpush1.bf16.msra.mxu0 %v1445
    %1494 = vmatprep.mubr.bf16.mxu0 %v1312
    %1495 = vmatmul.mubr.bf16.gmra.mrb[0].mxu0 %v1311
    %v1496 = vpop.f32.mrb[0].mxu0
    %v1497 = vadd.f32 %v1364, %v1496
    %v1498 = vpop.f32.mrb[0].mxu0
    %v1499 = vpop.f32.mrb[0].mxu0
    %v1500 = vadd.f32 %v1364, %v1499
    %v1501 = vpop.f32.mrb[0].mxu0
    %1502 = vmatprep.mubr.bf16.mxu0 %v1314
    %1503 = vmatmul.mubr.bf16.gmra.mrb[0].mxu0 %v1313
    %v1504 = vpop.f32.mrb[0].mxu0
    %v1505 = vadd.f32 %v1364, %v1504
    %v1506 = vpop.f32.mrb[0].mxu0
    %v1507 = vpop.f32.mrb[0].mxu0
    %v1508 = vadd.f32 %v1364, %v1507
    %v1509 = vpop.f32.mrb[0].mxu0
    %1510 = vmatprep.mubr.bf16.mxu0 %v1316
    %1511 = vmatmul.mubr.bf16.gmra.mrb[0].mxu0 %v1315
    %v1512 = vpop.f32.mrb[0].mxu0
    %v1513 = vadd.f32 %v1364, %v1512
    %v1514 = vpop.f32.mrb[0].mxu0
    %v1515 = vpop.f32.mrb[0].mxu0
    %v1516 = vadd.f32 %v1364, %v1515
    %v1517 = vpop.f32.mrb[0].mxu0
    %1518 = vmatprep.mubr.bf16.mxu0 %v1318
    %1519 = vmatmul.mubr.bf16.gmra.mrb[0].mxu0 %v1317
    %v1520 = vpop.f32.mrb[0].mxu0
    %v1521 = vadd.f32 %v1364, %v1520
    %v1522 = vpop.f32.mrb[0].mxu0
    %v1523 = vpop.f32.mrb[0].mxu0
    %v1524 = vadd.f32 %v1364, %v1523
    %v1525 = vpop.f32.mrb[0].mxu0
    %1526 = vmatprep.mubr.bf16.mxu0 %v1320
    %1527 = vmatmul.mubr.bf16.gmra.mrb[0].mxu0 %v1319
    %v1528 = vpop.f32.mrb[0].mxu0
    %v1529 = vadd.f32 %v1364, %v1528
    %v1530 = vpop.f32.mrb[0].mxu0
    %v1531 = vpop.f32.mrb[0].mxu0
    %v1532 = vadd.f32 %v1364, %v1531
    %v1533 = vpop.f32.mrb[0].mxu0
    %1534 = vmatprep.mubr.bf16.mxu0 %v1322
    %1535 = vmatmul.mubr.bf16.gmra.mrb[0].mxu0 %v1321
    %v1536 = vpop.f32.mrb[0].mxu0
    %v1537 = vadd.f32 %v1364, %v1536
    %v1538 = vpop.f32.mrb[0].mxu0
    %v1539 = vpop.f32.mrb[0].mxu0
    %v1540 = vadd.f32 %v1364, %v1539
    %v1541 = vpop.f32.mrb[0].mxu0
    %1542 = vmatprep.mubr.bf16.mxu0 %v1324
    %1543 = vmatmul.mubr.bf16.gmra.mrb[0].mxu0 %v1323
    %v1544 = vpop.f32.mrb[0].mxu0
    %v1545 = vadd.f32 %v1364, %v1544
    %v1546 = vpop.f32.mrb[0].mxu0
    %v1547 = vpop.f32.mrb[0].mxu0
    %v1548 = vadd.f32 %v1364, %v1547
    %v1549 = vpop.f32.mrb[0].mxu0
    %1550 = vmatprep.mubr.bf16.mxu0 %v1326
    %1551 = vmatmul.mubr.bf16.gmra.mrb[0].mxu0 %v1325
    %v1552 = vpop.f32.mrb[0].mxu0
    %v1553 = vadd.f32 %v1364, %v1552
    %v1554 = vpop.f32.mrb[0].mxu0
    %v1555 = vpop.f32.mrb[0].mxu0
    %v1556 = vadd.f32 %v1364, %v1555
    %v1557 = vpop.f32.mrb[0].mxu0
    %1558 = vdwg.mxu0
    %v1559 = vmax.f32 %v1497, 0.0
    %v1560 = vmax.f32 %v1500, 0.0
    %v1561 = vmax.f32 %v1505, 0.0
    %v1562 = vmax.f32 %v1508, 0.0
    %v1563 = vmax.f32 %v1513, 0.0
    %v1564 = vmax.f32 %v1516, 0.0
    %v1565 = vmax.f32 %v1521, 0.0
    %v1566 = vmax.f32 %v1524, 0.0
    %v1567 = vmax.f32 %v1529, 0.0
    %v1568 = vmax.f32 %v1532, 0.0
    %v1569 = vmax.f32 %v1537, 0.0
    %v1570 = vmax.f32 %v1540, 0.0
    %v1571 = vmax.f32 %v1545, 0.0
    %v1572 = vmax.f32 %v1548, 0.0
    %v1573 = vmax.f32 %v1553, 0.0
    %v1574 = vmax.f32 %v1556, 0.0
    %v1575 = vpack.c.bf16 %v1560, %v1559
    %v1576 = vpack.c.bf16 %v1562, %v1561
    %v1577 = vpack.c.bf16 %v1564, %v1563
    %v1578 = vpack.c.bf16 %v1566, %v1565
    %v1579 = vpack.c.bf16 %v1568, %v1567
    %v1580 = vpack.c.bf16 %v1570, %v1569
    %v1581 = vpack.c.bf16 %v1572, %v1571
    %v1582 = vpack.c.bf16 %v1574, %v1573
    %v1583 = vld [vmem:[%s5] sm:$0xf]
    %v1584 = vld [vmem:[%s5 + $0x4] sm:$0xf]
    %v1585 = vld [vmem:[%s5 + $0x8] sm:$0xf]
    %v1586 = vld [vmem:[%s5 + $0xc] sm:$0xf]
    %v1587 = vld [vmem:[%s5 + $0x10] sm:$0xf]
    %v1588 = vld [vmem:[%s5 + $0x14] sm:$0xf]
    %v1589 = vld [vmem:[%s5 + $0x18] sm:$0xf]
    %v1590 = vld [vmem:[%s5 + $0x1c] sm:$0xf]
    %v1591 = vld [vmem:[%s5 + $0x20] sm:$0xf]
    %v1592 = vld [vmem:[%s5 + $0x24] sm:$0xf]
    %v1593 = vld [vmem:[%s5 + $0x28] sm:$0xf]
    %v1594 = vld [vmem:[%s5 + $0x2c] sm:$0xf]
    %v1595 = vld [vmem:[%s5 + $0x30] sm:$0xf]
    %v1596 = vld [vmem:[%s5 + $0x34] sm:$0xf]
    %v1597 = vld [vmem:[%s5 + $0x38] sm:$0xf]
    %v1598 = vld [vmem:[%s5 + $0x3c] sm:$0xf]
    %v1599 = vld [vmem:[%s6] sm:$0x1]
    %v1601 = vlaneseq
    %v1602 = vshrl.u32 %v1601, 7
    %v1603 = vsub.s32 0, %v1602
    %v1604 = vrot.slane %v1599, %v1603
    %v1622 = vunpack.c.l.b16 %v1583
    %v1623 = vunpack.c.l.b16 %v1584
    %v1624 = vunpack.c.l.b16 %v1585
    %v1625 = vunpack.c.l.b16 %v1586
    %v1626 = vunpack.c.l.b16 %v1587
    %v1627 = vunpack.c.l.b16 %v1588
    %v1628 = vunpack.c.l.b16 %v1589
    %v1629 = vunpack.c.l.b16 %v1590
    %v1630 = vunpack.c.l.b16 %v1591
    %v1631 = vunpack.c.l.b16 %v1592
    %v1632 = vunpack.c.l.b16 %v1593
    %v1633 = vunpack.c.l.b16 %v1594
    %v1634 = vunpack.c.l.b16 %v1595
    %v1635 = vunpack.c.l.b16 %v1596
    %v1636 = vunpack.c.l.b16 %v1597
    %v1637 = vunpack.c.l.b16 %v1598
    %v1638 = vpack.c.b16 %v1623, %v1622
    %v1639 = vpack.c.b16 %v1625, %v1624
    %v1640 = vpack.c.b16 %v1627, %v1626
    %v1641 = vpack.c.b16 %v1629, %v1628
    %v1642 = vpack.c.b16 %v1631, %v1630
    %v1643 = vpack.c.b16 %v1633, %v1632
    %v1644 = vpack.c.b16 %v1635, %v1634
    %v1645 = vpack.c.b16 %v1637, %v1636
    %1654 = vmatprep.subr.bf16.mxu0 0
    %1655 = vmatpush1.bf16.msra.mxu0 %v1638
    %1656 = vmatprep.subr.bf16.mxu0 0
    %1657 = vmatpush1.bf16.msra.mxu0 %v1639
    %1658 = vmatprep.subr.bf16.mxu0 0
    %1659 = vmatpush1.bf16.msra.mxu0 %v1640
    %1660 = vmatprep.subr.bf16.mxu0 0
    %1661 = vmatpush1.bf16.msra.mxu0 %v1641
    %1662 = vmatprep.subr.bf16.mxu0 0
    %1663 = vmatpush1.bf16.msra.mxu0 %v1642
    %1664 = vmatprep.subr.bf16.mxu0 0
    %1665 = vmatpush1.bf16.msra.mxu0 %v1643
    %1666 = vmatprep.subr.bf16.mxu0 0
    %1667 = vmatpush1.bf16.msra.mxu0 %v1644
    %1668 = vmatprep.subr.bf16.mxu0 0
    %1669 = vmatpush1.bf16.msra.mxu0 %v1645
    %1670 = vmatprep.subr.bf16.mxu0 0
    %1671 = vmatpush1.bf16.msra.mxu0 0
    %1672 = vmatprep.subr.bf16.mxu0 0
    %1673 = vmatpush1.bf16.msra.mxu0 0
    %1674 = vmatprep.subr.bf16.mxu0 0
    %1675 = vmatpush1.bf16.msra.mxu0 0
    %1676 = vmatprep.subr.bf16.mxu0 0
    %1677 = vmatpush1.bf16.msra.mxu0 0
    %1678 = vmatprep.subr.bf16.mxu0 0
    %1679 = vmatpush1.bf16.msra.mxu0 0
    %1680 = vmatprep.subr.bf16.mxu0 0
    %1681 = vmatpush1.bf16.msra.mxu0 0
    %1682 = vmatprep.subr.bf16.mxu0 0
    %1683 = vmatpush1.bf16.msra.mxu0 0
    %1684 = vmatprep.subr.bf16.mxu0 0
    %1685 = vmatpush1.bf16.msra.mxu0 0
    %1686 = vmatprep.mubr.bf16.mxu0 0
    %1687 = vmatmul.mubr.bf16.gmra.mrb[0].mxu0 %v1575
    %v1688 = vpop.f32.mrb[0].mxu0
    %v1689 = vadd.f32 %v1604, %v1688
    %v1690 = vpop.f32.mrb[0].mxu0
    %v1691 = vpop.f32.mrb[0].mxu0
    %v1692 = vadd.f32 %v1604, %v1691
    %v1693 = vpop.f32.mrb[0].mxu0
    %1694 = vmatprep.mubr.bf16.mxu0 0
    %1695 = vmatmul.mubr.bf16.gmra.mrb[0].mxu0 %v1576
    %v1696 = vpop.f32.mrb[0].mxu0
    %v1697 = vadd.f32 %v1604, %v1696
    %v1698 = vpop.f32.mrb[0].mxu0
    %v1699 = vpop.f32.mrb[0].mxu0
    %v1700 = vadd.f32 %v1604, %v1699
    %v1701 = vpop.f32.mrb[0].mxu0
    %1702 = vmatprep.mubr.bf16.mxu0 0
    %1703 = vmatmul.mubr.bf16.gmra.mrb[0].mxu0 %v1577
    %v1704 = vpop.f32.mrb[0].mxu0
    %v1705 = vadd.f32 %v1604, %v1704
    %v1706 = vpop.f32.mrb[0].mxu0
    %v1707 = vpop.f32.mrb[0].mxu0
    %v1708 = vadd.f32 %v1604, %v1707
    %v1709 = vpop.f32.mrb[0].mxu0
    %1710 = vmatprep.mubr.bf16.mxu0 0
    %1711 = vmatmul.mubr.bf16.gmra.mrb[0].mxu0 %v1578
    %v1712 = vpop.f32.mrb[0].mxu0
    %v1713 = vadd.f32 %v1604, %v1712
    %v1714 = vpop.f32.mrb[0].mxu0
    %v1715 = vpop.f32.mrb[0].mxu0
    %v1716 = vadd.f32 %v1604, %v1715
    %v1717 = vpop.f32.mrb[0].mxu0
    %1718 = vmatprep.mubr.bf16.mxu0 0
    %1719 = vmatmul.mubr.bf16.gmra.mrb[0].mxu0 %v1579
    %v1720 = vpop.f32.mrb[0].mxu0
    %v1721 = vadd.f32 %v1604, %v1720
    %v1722 = vpop.f32.mrb[0].mxu0
    %v1723 = vpop.f32.mrb[0].mxu0
    %v1724 = vadd.f32 %v1604, %v1723
    %v1725 = vpop.f32.mrb[0].mxu0
    %1726 = vmatprep.mubr.bf16.mxu0 0
    %1727 = vmatmul.mubr.bf16.gmra.mrb[0].mxu0 %v1580
    %v1728 = vpop.f32.mrb[0].mxu0
    %v1729 = vadd.f32 %v1604, %v1728
    %v1730 = vpop.f32.mrb[0].mxu0
    %v1731 = vpop.f32.mrb[0].mxu0
    %v1732 = vadd.f32 %v1604, %v1731
    %v1733 = vpop.f32.mrb[0].mxu0
    %1734 = vmatprep.mubr.bf16.mxu0 0
    %1735 = vmatmul.mubr.bf16.gmra.mrb[0].mxu0 %v1581
    %v1736 = vpop.f32.mrb[0].mxu0
    %v1737 = vadd.f32 %v1604, %v1736
    %v1738 = vpop.f32.mrb[0].mxu0
    %v1739 = vpop.f32.mrb[0].mxu0
    %v1740 = vadd.f32 %v1604, %v1739
    %v1741 = vpop.f32.mrb[0].mxu0
    %1742 = vmatprep.mubr.bf16.mxu0 0
    %1743 = vmatmul.mubr.bf16.gmra.mrb[0].mxu0 %v1582
    %v1744 = vpop.f32.mrb[0].mxu0
    %v1745 = vadd.f32 %v1604, %v1744
    %v1746 = vpop.f32.mrb[0].mxu0
    %v1747 = vpop.f32.mrb[0].mxu0
    %v1748 = vadd.f32 %v1604, %v1747
    %v1749 = vpop.f32.mrb[0].mxu0
    %1750 = vdwg.mxu0
    %v1751 = vmax.f32 %v1689, 0.0
    %v1752 = vmax.f32 %v1692, 0.0
    %v1753 = vmax.f32 %v1697, 0.0
    %v1754 = vmax.f32 %v1700, 0.0
    %v1755 = vmax.f32 %v1705, 0.0
    %v1756 = vmax.f32 %v1708, 0.0
    %v1757 = vmax.f32 %v1713, 0.0
    %v1758 = vmax.f32 %v1716, 0.0
    %v1759 = vmax.f32 %v1721, 0.0
    %v1760 = vmax.f32 %v1724, 0.0
    %v1761 = vmax.f32 %v1729, 0.0
    %v1762 = vmax.f32 %v1732, 0.0
    %v1763 = vmax.f32 %v1737, 0.0
    %v1764 = vmax.f32 %v1740, 0.0
    %v1765 = vmax.f32 %v1745, 0.0
    %v1766 = vmax.f32 %v1748, 0.0
    %v1767 = vpack.c.bf16 %v1752, %v1751
    %v1768 = vpack.c.bf16 %v1754, %v1753
    %v1769 = vpack.c.bf16 %v1756, %v1755
    %v1770 = vpack.c.bf16 %v1758, %v1757
    %v1771 = vpack.c.bf16 %v1760, %v1759
    %v1772 = vpack.c.bf16 %v1762, %v1761
    %v1773 = vpack.c.bf16 %v1764, %v1763
    %v1774 = vpack.c.bf16 %v1766, %v1765
    %v1775 = vld [vmem:[%s7] sm:$0xf]
    %v1776 = vld [vmem:[%s7 + $0x4] sm:$0xf]
    %v1777 = vld [vmem:[%s7 + $0x8] sm:$0xf]
    %v1778 = vld [vmem:[%s7 + $0xc] sm:$0xf]
    %v1779 = vld [vmem:[%s7 + $0x10] sm:$0xf]
    %v1780 = vld [vmem:[%s7 + $0x14] sm:$0xf]
    %v1781 = vld [vmem:[%s7 + $0x18] sm:$0xf]
    %v1782 = vld [vmem:[%s7 + $0x1c] sm:$0xf]
    %v1783 = vld [vmem:[%s7 + $0x20] sm:$0xf]
    %v1784 = vld [vmem:[%s7 + $0x24] sm:$0xf]
    %v1785 = vld [vmem:[%s7 + $0x28] sm:$0xf]
    %v1786 = vld [vmem:[%s7 + $0x2c] sm:$0xf]
    %v1787 = vld [vmem:[%s7 + $0x30] sm:$0xf]
    %v1788 = vld [vmem:[%s7 + $0x34] sm:$0xf]
    %v1789 = vld [vmem:[%s7 + $0x38] sm:$0xf]
    %v1790 = vld [vmem:[%s7 + $0x3c] sm:$0xf]
    %v1791 = vld [vmem:[%s8] sm:$0x1]
    %v1793 = vlaneseq
    %v1794 = vshrl.u32 %v1793, 7
    %v1795 = vsub.s32 0, %v1794
    %v1796 = vrot.slane %v1791, %v1795
    %v1814 = vunpack.c.l.b16 %v1775
    %v1815 = vunpack.c.l.b16 %v1776
    %v1816 = vunpack.c.l.b16 %v1777
    %v1817 = vunpack.c.l.b16 %v1778
    %v1818 = vunpack.c.l.b16 %v1779
    %v1819 = vunpack.c.l.b16 %v1780
    %v1820 = vunpack.c.l.b16 %v1781
    %v1821 = vunpack.c.l.b16 %v1782
    %v1822 = vunpack.c.l.b16 %v1783
    %v1823 = vunpack.c.l.b16 %v1784
    %v1824 = vunpack.c.l.b16 %v1785
    %v1825 = vunpack.c.l.b16 %v1786
    %v1826 = vunpack.c.l.b16 %v1787
    %v1827 = vunpack.c.l.b16 %v1788
    %v1828 = vunpack.c.l.b16 %v1789
    %v1829 = vunpack.c.l.b16 %v1790
    %v1830 = vpack.c.b16 %v1815, %v1814
    %v1831 = vpack.c.b16 %v1817, %v1816
    %v1832 = vpack.c.b16 %v1819, %v1818
    %v1833 = vpack.c.b16 %v1821, %v1820
    %v1834 = vpack.c.b16 %v1823, %v1822
    %v1835 = vpack.c.b16 %v1825, %v1824
    %v1836 = vpack.c.b16 %v1827, %v1826
    %v1837 = vpack.c.b16 %v1829, %v1828
    %1846 = vmatprep.subr.bf16.mxu0 0
    %1847 = vmatpush1.bf16.msra.mxu0 %v1830
    %1848 = vmatprep.subr.bf16.mxu0 0
    %1849 = vmatpush1.bf16.msra.mxu0 %v1831
    %1850 = vmatprep.subr.bf16.mxu0 0
    %1851 = vmatpush1.bf16.msra.mxu0 %v1832
    %1852 = vmatprep.subr.bf16.mxu0 0
    %1853 = vmatpush1.bf16.msra.mxu0 %v1833
    %1854 = vmatprep.subr.bf16.mxu0 0
    %1855 = vmatpush1.bf16.msra.mxu0 %v1834
    %1856 = vmatprep.subr.bf16.mxu0 0
    %1857 = vmatpush1.bf16.msra.mxu0 %v1835
    %1858 = vmatprep.subr.bf16.mxu0 0
    %1859 = vmatpush1.bf16.msra.mxu0 %v1836
    %1860 = vmatprep.subr.bf16.mxu0 0
    %1861 = vmatpush1.bf16.msra.mxu0 %v1837
    %1862 = vmatprep.subr.bf16.mxu0 0
    %1863 = vmatpush1.bf16.msra.mxu0 0
    %1864 = vmatprep.subr.bf16.mxu0 0
    %1865 = vmatpush1.bf16.msra.mxu0 0
    %1866 = vmatprep.subr.bf16.mxu0 0
    %1867 = vmatpush1.bf16.msra.mxu0 0
    %1868 = vmatprep.subr.bf16.mxu0 0
    %1869 = vmatpush1.bf16.msra.mxu0 0
    %1870 = vmatprep.subr.bf16.mxu0 0
    %1871 = vmatpush1.bf16.msra.mxu0 0
    %1872 = vmatprep.subr.bf16.mxu0 0
    %1873 = vmatpush1.bf16.msra.mxu0 0
    %1874 = vmatprep.subr.bf16.mxu0 0
    %1875 = vmatpush1.bf16.msra.mxu0 0
    %1876 = vmatprep.subr.bf16.mxu0 0
    %1877 = vmatpush1.bf16.msra.mxu0 0
    %1878 = vmatprep.mubr.bf16.mxu0 0
    %1879 = vmatmul.mubr.bf16.gmra.mrb[0].mxu0 %v1767
    %v1880 = vpop.f32.mrb[0].mxu0
    %v1881 = vadd.f32 %v1796, %v1880
    %v1882 = vpop.f32.mrb[0].mxu0
    %v1883 = vpop.f32.mrb[0].mxu0
    %v1884 = vadd.f32 %v1796, %v1883
    %v1885 = vpop.f32.mrb[0].mxu0
    %1886 = vmatprep.mubr.bf16.mxu0 0
    %1887 = vmatmul.mubr.bf16.gmra.mrb[0].mxu0 %v1768
    %v1888 = vpop.f32.mrb[0].mxu0
    %v1889 = vadd.f32 %v1796, %v1888
    %v1890 = vpop.f32.mrb[0].mxu0
    %v1891 = vpop.f32.mrb[0].mxu0
    %v1892 = vadd.f32 %v1796, %v1891
    %v1893 = vpop.f32.mrb[0].mxu0
    %1894 = vmatprep.mubr.bf16.mxu0 0
    %1895 = vmatmul.mubr.bf16.gmra.mrb[0].mxu0 %v1769
    %v1896 = vpop.f32.mrb[0].mxu0
    %v1897 = vadd.f32 %v1796, %v1896
    %v1898 = vpop.f32.mrb[0].mxu0
    %v1899 = vpop.f32.mrb[0].mxu0
    %v1900 = vadd.f32 %v1796, %v1899
    %v1901 = vpop.f32.mrb[0].mxu0
    %1902 = vmatprep.mubr.bf16.mxu0 0
    %1903 = vmatmul.mubr.bf16.gmra.mrb[0].mxu0 %v1770
    %v1904 = vpop.f32.mrb[0].mxu0
    %v1905 = vadd.f32 %v1796, %v1904
    %v1906 = vpop.f32.mrb[0].mxu0
    %v1907 = vpop.f32.mrb[0].mxu0
    %v1908 = vadd.f32 %v1796, %v1907
    %v1909 = vpop.f32.mrb[0].mxu0
    %1910 = vmatprep.mubr.bf16.mxu0 0
    %1911 = vmatmul.mubr.bf16.gmra.mrb[0].mxu0 %v1771
    %v1912 = vpop.f32.mrb[0].mxu0
    %v1913 = vadd.f32 %v1796, %v1912
    %v1914 = vpop.f32.mrb[0].mxu0
    %v1915 = vpop.f32.mrb[0].mxu0
    %v1916 = vadd.f32 %v1796, %v1915
    %v1917 = vpop.f32.mrb[0].mxu0
    %1918 = vmatprep.mubr.bf16.mxu0 0
    %1919 = vmatmul.mubr.bf16.gmra.mrb[0].mxu0 %v1772
    %v1920 = vpop.f32.mrb[0].mxu0
    %v1921 = vadd.f32 %v1796, %v1920
    %v1922 = vpop.f32.mrb[0].mxu0
    %v1923 = vpop.f32.mrb[0].mxu0
    %v1924 = vadd.f32 %v1796, %v1923
    %v1925 = vpop.f32.mrb[0].mxu0
    %1926 = vmatprep.mubr.bf16.mxu0 0
    %1927 = vmatmul.mubr.bf16.gmra.mrb[0].mxu0 %v1773
    %v1928 = vpop.f32.mrb[0].mxu0
    %v1929 = vadd.f32 %v1796, %v1928
    %v1930 = vpop.f32.mrb[0].mxu0
    %v1931 = vpop.f32.mrb[0].mxu0
    %v1932 = vadd.f32 %v1796, %v1931
    %v1933 = vpop.f32.mrb[0].mxu0
    %1934 = vmatprep.mubr.bf16.mxu0 0
    %1935 = vmatmul.mubr.bf16.gmra.mrb[0].mxu0 %v1774
    %v1936 = vpop.f32.mrb[0].mxu0
    %v1937 = vadd.f32 %v1796, %v1936
    %v1938 = vpop.f32.mrb[0].mxu0
    %v1939 = vpop.f32.mrb[0].mxu0
    %v1940 = vadd.f32 %v1796, %v1939
    %v1941 = vpop.f32.mrb[0].mxu0
    %1942 = vdwg.mxu0
    %1943 = vmax.xlane.f32.xlu0 %v1881
    %v1944 = vpop.xlane.xlu0 %1943
    %1945 = vmax.xlane.f32.xlu0 %v1884
    %v1946 = vpop.xlane.xlu0 %1945
    %1947 = vmax.xlane.f32.xlu0 %v1889
    %v1948 = vpop.xlane.xlu0 %1947
    %1949 = vmax.xlane.f32.xlu0 %v1892
    %v1950 = vpop.xlane.xlu0 %1949
    %1951 = vmax.xlane.f32.xlu0 %v1897
    %v1952 = vpop.xlane.xlu0 %1951
    %1953 = vmax.xlane.f32.xlu0 %v1900
    %v1954 = vpop.xlane.xlu0 %1953
    %1955 = vmax.xlane.f32.xlu0 %v1905
    %v1956 = vpop.xlane.xlu0 %1955
    %1957 = vmax.xlane.f32.xlu0 %v1908
    %v1958 = vpop.xlane.xlu0 %1957
    %1959 = vmax.xlane.f32.xlu0 %v1913
    %v1960 = vpop.xlane.xlu0 %1959
    %1961 = vmax.xlane.f32.xlu0 %v1916
    %v1962 = vpop.xlane.xlu0 %1961
    %1963 = vmax.xlane.f32.xlu0 %v1921
    %v1964 = vpop.xlane.xlu0 %1963
    %1965 = vmax.xlane.f32.xlu0 %v1924
    %v1966 = vpop.xlane.xlu0 %1965
    %1967 = vmax.xlane.f32.xlu0 %v1929
    %v1968 = vpop.xlane.xlu0 %1967
    %1969 = vmax.xlane.f32.xlu0 %v1932
    %v1970 = vpop.xlane.xlu0 %1969
    %1971 = vmax.xlane.f32.xlu0 %v1937
    %v1972 = vpop.xlane.xlu0 %1971
    %1973 = vmax.xlane.f32.xlu0 %v1940
    %v1974 = vpop.xlane.xlu0 %1973
    %v1975 = vsub.f32 %v1881, %v1944
    %v1976 = vsub.f32 %v1884, %v1946
    %v1977 = vsub.f32 %v1889, %v1948
    %v1978 = vsub.f32 %v1892, %v1950
    %v1979 = vsub.f32 %v1897, %v1952
    %v1980 = vsub.f32 %v1900, %v1954
    %v1981 = vsub.f32 %v1905, %v1956
    %v1982 = vsub.f32 %v1908, %v1958
    %v1983 = vsub.f32 %v1913, %v1960
    %v1984 = vsub.f32 %v1916, %v1962
    %v1985 = vsub.f32 %v1921, %v1964
    %v1986 = vsub.f32 %v1924, %v1966
    %v1987 = vsub.f32 %v1929, %v1968
    %v1988 = vsub.f32 %v1932, %v1970
    %v1989 = vsub.f32 %v1937, %v1972
    %v1990 = vsub.f32 %v1940, %v1974
    %v1991 = vmul.f32 %v1975, 1.442695
    %v1992 = vpow.pop %v1991
    %v1993 = vmul.f32 %v1976, 1.442695
    %v1994 = vpow.pop %v1993
    %v1995 = vmul.f32 %v1977, 1.442695
    %v1996 = vpow.pop %v1995
    %v1997 = vmul.f32 %v1978, 1.442695
    %v1998 = vpow.pop %v1997
    %v1999 = vmul.f32 %v1979, 1.442695
    %v2000 = vpow.pop %v1999
    %v2001 = vmul.f32 %v1980, 1.442695
    %v2002 = vpow.pop %v2001
    %v2003 = vmul.f32 %v1981, 1.442695
    %v2004 = vpow.pop %v2003
    %v2005 = vmul.f32 %v1982, 1.442695
    %v2006 = vpow.pop %v2005
    %v2007 = vmul.f32 %v1983, 1.442695
    %v2008 = vpow.pop %v2007
    %v2009 = vmul.f32 %v1984, 1.442695
    %v2010 = vpow.pop %v2009
    %v2011 = vmul.f32 %v1985, 1.442695
    %v2012 = vpow.pop %v2011
    %v2013 = vmul.f32 %v1986, 1.442695
    %v2014 = vpow.pop %v2013
    %v2015 = vmul.f32 %v1987, 1.442695
    %v2016 = vpow.pop %v2015
    %v2017 = vmul.f32 %v1988, 1.442695
    %v2018 = vpow.pop %v2017
    %v2019 = vmul.f32 %v1989, 1.442695
    %v2020 = vpow.pop %v2019
    %v2021 = vmul.f32 %v1990, 1.442695
    %v2022 = vpow.pop %v2021
    %2023 = vadd.xlane.f32.xlu0 %v1992
    %v2024 = vpop.xlane.xlu0 %2023
    %2025 = vadd.xlane.f32.xlu0 %v1994
    %v2026 = vpop.xlane.xlu0 %2025
    %2027 = vadd.xlane.f32.xlu0 %v1996
    %v2028 = vpop.xlane.xlu0 %2027
    %2029 = vadd.xlane.f32.xlu0 %v1998
    %v2030 = vpop.xlane.xlu0 %2029
    %2031 = vadd.xlane.f32.xlu0 %v2000
    %v2032 = vpop.xlane.xlu0 %2031
    %2033 = vadd.xlane.f32.xlu0 %v2002
    %v2034 = vpop.xlane.xlu0 %2033
    %2035 = vadd.xlane.f32.xlu0 %v2004
    %v2036 = vpop.xlane.xlu0 %2035
    %2037 = vadd.xlane.f32.xlu0 %v2006
    %v2038 = vpop.xlane.xlu0 %2037
    %2039 = vadd.xlane.f32.xlu0 %v2008
    %v2040 = vpop.xlane.xlu0 %2039
    %2041 = vadd.xlane.f32.xlu0 %v2010
    %v2042 = vpop.xlane.xlu0 %2041
    %2043 = vadd.xlane.f32.xlu0 %v2012
    %v2044 = vpop.xlane.xlu0 %2043
    %2045 = vadd.xlane.f32.xlu0 %v2014
    %v2046 = vpop.xlane.xlu0 %2045
    %2047 = vadd.xlane.f32.xlu0 %v2016
    %v2048 = vpop.xlane.xlu0 %2047
    %2049 = vadd.xlane.f32.xlu0 %v2018
    %v2050 = vpop.xlane.xlu0 %2049
    %2051 = vadd.xlane.f32.xlu0 %v2020
    %v2052 = vpop.xlane.xlu0 %2051
    %2053 = vadd.xlane.f32.xlu0 %v2022
    %v2054 = vpop.xlane.xlu0 %2053
    %v2055 = vlog2.pop %v2024
    %v2056 = vmul.f32 %v2055, 0.6931472
    %v2057 = vlog2.pop %v2026
    %v2058 = vmul.f32 %v2057, 0.6931472
    %v2059 = vlog2.pop %v2028
    %v2060 = vmul.f32 %v2059, 0.6931472
    %v2061 = vlog2.pop %v2030
    %v2062 = vmul.f32 %v2061, 0.6931472
    %v2063 = vlog2.pop %v2032
    %v2064 = vmul.f32 %v2063, 0.6931472
    %v2065 = vlog2.pop %v2034
    %v2066 = vmul.f32 %v2065, 0.6931472
    %v2067 = vlog2.pop %v2036
    %v2068 = vmul.f32 %v2067, 0.6931472
    %v2069 = vlog2.pop %v2038
    %v2070 = vmul.f32 %v2069, 0.6931472
    %v2071 = vlog2.pop %v2040
    %v2072 = vmul.f32 %v2071, 0.6931472
    %v2073 = vlog2.pop %v2042
    %v2074 = vmul.f32 %v2073, 0.6931472
    %v2075 = vlog2.pop %v2044
    %v2076 = vmul.f32 %v2075, 0.6931472
    %v2077 = vlog2.pop %v2046
    %v2078 = vmul.f32 %v2077, 0.6931472
    %v2079 = vlog2.pop %v2048
    %v2080 = vmul.f32 %v2079, 0.6931472
    %v2081 = vlog2.pop %v2050
    %v2082 = vmul.f32 %v2081, 0.6931472
    %v2083 = vlog2.pop %v2052
    %v2084 = vmul.f32 %v2083, 0.6931472
    %v2085 = vlog2.pop %v2054
    %v2086 = vmul.f32 %v2085, 0.6931472
    %v2087 = vsub.f32 %v1975, %v2056
    %v2088 = vsub.f32 %v1976, %v2058
    %v2089 = vsub.f32 %v1977, %v2060
    %v2090 = vsub.f32 %v1978, %v2062
    %v2091 = vsub.f32 %v1979, %v2064
    %v2092 = vsub.f32 %v1980, %v2066
    %v2093 = vsub.f32 %v1981, %v2068
    %v2094 = vsub.f32 %v1982, %v2070
    %v2095 = vsub.f32 %v1983, %v2072
    %v2096 = vsub.f32 %v1984, %v2074
    %v2097 = vsub.f32 %v1985, %v2076
    %v2098 = vsub.f32 %v1986, %v2078
    %v2099 = vsub.f32 %v1987, %v2080
    %v2100 = vsub.f32 %v1988, %v2082
    %v2101 = vsub.f32 %v1989, %v2084
    %v2102 = vsub.f32 %v1990, %v2086
    %2103 = vst [vmem:[#allocation2] sm:$0xff] %v2087
    %2104 = vst [vmem:[#allocation2 + $0x8] sm:$0xff] %v2088
    %2105 = vst [vmem:[#allocation2 + $0x10] sm:$0xff] %v2089
    %2106 = vst [vmem:[#allocation2 + $0x18] sm:$0xff] %v2090
    %2107 = vst [vmem:[#allocation2 + $0x20] sm:$0xff] %v2091
    %2108 = vst [vmem:[#allocation2 + $0x28] sm:$0xff] %v2092
    %2109 = vst [vmem:[#allocation2 + $0x30] sm:$0xff] %v2093
    %2110 = vst [vmem:[#allocation2 + $0x38] sm:$0xff] %v2094
    %2111 = vst [vmem:[#allocation2 + $0x40] sm:$0xff] %v2095
    %2112 = vst [vmem:[#allocation2 + $0x48] sm:$0xff] %v2096
    %2113 = vst [vmem:[#allocation2 + $0x50] sm:$0xff] %v2097
    %2114 = vst [vmem:[#allocation2 + $0x58] sm:$0xff] %v2098
    %2115 = vst [vmem:[#allocation2 + $0x60] sm:$0xff] %v2099
    %2116 = vst [vmem:[#allocation2 + $0x68] sm:$0xff] %v2100
    %2117 = vst [vmem:[#allocation2 + $0x70] sm:$0xff] %v2101
    %2118 = vst [vmem:[#allocation2 + $0x78] sm:$0xff] %v2102
    // Predicated region
    $region38: #{tpu_custom_call.1} parent=1 // pred_check
      _
    $region39: #{tpu_custom_call.1} parent=1 // pred_check_branch
      %2120 = sbr.rel (0) target = $region41
    $region40: #{tpu_custom_call.1} parent=1 // pred_region
      %s2122 = ssub.s32 2048, 2048
      %2123 = vsyncadd [#allocation3], %s2122
      %s2124 = sshll.u32 [#allocation2], 4
      %s2125 = int_to_ptr.vmem [resolvable:$true] %s2124
      %2130 = dma.vmem_to_hbm [thread:$0]  %s2125, 2048, %s9, [#allocation3], 128, 128, 8
    $region41: #{tpu_custom_call.1} parent=1 // pred_fallthru
      _
    // Predicated region
    $region42: #{tpu_custom_call.1} parent=1 // pred_check
      _
    $region43: #{tpu_custom_call.1} parent=1 // pred_check_branch
      %2132 = sbr.rel (0) target = $region45
    $region44: #{tpu_custom_call.1} parent=1 // pred_region
      %2133 = dma.done [#allocation3], 2048
    $region45: #{tpu_custom_call.1} parent=1 // pred_fallthru
      _
    %2134 = vsyncpa [#allocation3], 1

</llo_original>
